<compile_context>
chip_gen: v7x
topology: tpu7x:2x2x1
jax: 0.10.0
libtpu: 0.0.40
codegen_flags: <defaults>
</compile_context>

<pallas_src>
import jax
import jax.numpy as jnp
from jax.experimental import pallas as pl
from jax.experimental.pallas import tpu as pltpu


# -----------------------------------------------------------------------------
# math helpers (pure jnp, traced inside the Pallas kernel body), (L, C) layout
# -----------------------------------------------------------------------------
def _efficient_attention(x, wqkv_t, bqkv, wr_t, br, mask_b, m1, m2):
    """Efficient attention on an (L, C) tile.

    x:       (L, C) f32 activations (upcast from the bf16 feature tile)
    wqkv_t:  (C, 3C) bf16 fused, pre-transposed q/k/v 1x1-conv weights
    bqkv:    (1, 3C) f32 fused q/k/v biases
    wr_t:    (C, C)  bf16 pre-transposed reprojection weights
    br:      (1, C)  f32 reprojection bias
    mask_b:  (C, C)  bf16 block-diagonal 0/1 head mask (host precomputed)
    m1, m2:  (C, H) / (H, C) bf16 one-hot factors of mask_b (mask_b == m1 @ m2)
    """
    C = x.shape[1]
    xb = x.astype(jnp.bfloat16)

    # Fused q/k/v projection: one (L,C)@(C,3C) weight push instead of three.
    qkv = jnp.dot(xb, wqkv_t, preferred_element_type=jnp.float32) + bqkv
    q = qkv[:, :C]
    k = qkv[:, C:2 * C]
    v = qkv[:, 2 * C:]

    # Keys: softmax over the spatial axis (torch dim=2); independent per channel.
    k_max = jnp.max(k, axis=0, keepdims=True)
    k_exp = jnp.exp(k - k_max)
    k_sum = jnp.sum(k_exp, axis=0, keepdims=True)
    key = k_exp * pl.reciprocal(k_sum, approx=True)          # EUP slot, off the VALU path

    # Queries: softmax over channels *within each head* (torch dim=1). Stabilized with the
    # per-position global max (mathematically identical); per-head sums via the factored
    # block-diagonal mask -> two skinny bf16 matmuls instead of a dense f32 (C,C) matmul.
    q_max = jnp.max(q, axis=1, keepdims=True)
    q_exp = jnp.exp(q - q_max)
    denom_h = jnp.dot(q_exp.astype(jnp.bfloat16), m1,
                      preferred_element_type=jnp.float32)    # (L, H) per-head sums
    denom = jnp.dot(denom_h.astype(jnp.bfloat16), m2,
                    preferred_element_type=jnp.float32)      # (L, C) broadcast back
    # TODO(synk): per-head max stabilization; epsilon guards a fully-underflowed head.
    query = q_exp * pl.reciprocal(jnp.maximum(denom, 1e-20), approx=True)

    # Dense (C, C) context (contraction over L); only per-head diagonal blocks are kept.
    # TODO(synk): on v5e (128-wide MXU) the per-head 64-wide formulation is ~8x cheaper
    #             for this stage; keep the dense masked form on v6e/v7x.
    context = jax.lax.dot_general(
        key.astype(jnp.bfloat16), v.astype(jnp.bfloat16),
        dimension_numbers=(((0,), (0,)), ((), ())),
        preferred_element_type=jnp.float32)
    context_b = context.astype(jnp.bfloat16) * mask_b        # exact 0/1 mask in bf16

    attended = jnp.dot(query.astype(jnp.bfloat16), context_b,
                       preferred_element_type=jnp.float32)
    reproj = jnp.dot(attended.astype(jnp.bfloat16), wr_t,
                     preferred_element_type=jnp.float32) + br
    return reproj + x                                         # residual


def _feed_forward(a, w1_t, b1, w2_t, b2, gamma, beta):
    """Conv1x1 -> ReLU -> Conv1x1 + residual, LayerNorm over channels (lane axis)."""
    h = jnp.maximum(jnp.dot(a.astype(jnp.bfloat16), w1_t,
                            preferred_element_type=jnp.float32) + b1, 0.0)
    f = jnp.dot(h.astype(jnp.bfloat16), w2_t,
                preferred_element_type=jnp.float32) + b2
    y = f + a
    mu = jnp.mean(y, axis=1, keepdims=True)
    var = jnp.mean((y - mu) ** 2, axis=1, keepdims=True)
    yn = (y - mu) * jax.lax.rsqrt(var + 1e-5)
    return yn * gamma + beta


# -----------------------------------------------------------------------------
# Pallas kernel: one batch element per grid step, everything resident in VMEM.
# -----------------------------------------------------------------------------
def fusion_head_kernel(
    xr_ref, xf_ref,                    # (1, L, C) bf16 feature tiles
    rwqkv, fwqkv,                      # (C, 3C) bf16 fused q/k/v weights (pre-transposed)
    rwr, fwr,                          # (C, C)  bf16 reprojection weights
    w1, w2,                            # (C, C)  bf16 FFN weights
    wl,                                # (C, CLSP) bf16 final linear weight (lane padded)
    mask_ref,                          # (C, C)  bf16 block-diagonal head mask
    m1_ref, m2_ref,                    # (C, H) / (H, C) bf16 mask factors
    bqkv_ref,                          # (2, 3C) f32 fused q/k/v biases (row 0: rgb, 1: flow)
    brest_ref,                         # (6, C)  f32: rbr, fbr, b1, b2, ln_gamma, ln_beta
    bl_ref,                            # (1, CLSP) f32 final bias (lane padded)
    out_ref,                           # (1, 1, CLSP) f32
):
    mask_b = mask_ref[...]
    m1 = m1_ref[...]
    m2 = m2_ref[...]
    bqkv = bqkv_ref[...]
    brest = brest_ref[...]

    xr = xr_ref[0].astype(jnp.float32)           # (L, C)
    xf = xf_ref[0].astype(jnp.float32)

    rgb_out = _efficient_attention(xr, rwqkv[...], bqkv[0:1, :],
                                   rwr[...], brest[0:1, :], mask_b, m1, m2)
    flow_out = _efficient_attention(xf, fwqkv[...], bqkv[1:2, :],
                                    fwr[...], brest[1:2, :], mask_b, m1, m2)

    add_attn = rgb_out + flow_out                # CTFB fusion (addition)
    ffn_out = _feed_forward(add_attn, w1[...], brest[2:3, :], w2[...], brest[3:4, :],
                            brest[4:5, :], brest[5:6, :])

    # AdaptiveAvgPool3d((1,1,1)) over T,H,W == mean over L; stays a lane-dense (1, C) row.
    pooled = jnp.mean(ffn_out, axis=0, keepdims=True)
    logits = jnp.dot(pooled.astype(jnp.bfloat16), wl[...],
                     preferred_element_type=jnp.float32) + bl_ref[...]
    out_ref[0] = logits                          # unmasked lane-dense store (CLSP % 128 == 0)


# -----------------------------------------------------------------------------
# wrapper
# -----------------------------------------------------------------------------
def conv_transformer_fusion_head(x_rgb, x_flow, params, *, n_heads):
    """x_rgb, x_flow: (N, C, L) backbone features. Returns (N, class_nb) f32 logits."""
    N, C, L = x_rgb.shape
    class_nb = params["wl"].shape[0]
    assert C % n_heads == 0, "channels must divide evenly into heads"
    hd = C // n_heads
    clsp = ((class_nb + 127) // 128) * 128       # lane-dense padded logits width
    bf = jnp.bfloat16

    # Lane-dense working layout: (N, L, C), channels in the lane dimension, bf16 features.
    # TODO(synk): emit the backbone mixed_5c features directly as (N, L, C) bf16 to skip
    #             this host-side transpose + cast HBM round trip.
    xr = jnp.transpose(x_rgb, (0, 2, 1)).astype(bf)
    xf = jnp.transpose(x_flow, (0, 2, 1)).astype(bf)

    def w_t(name):                               # pre-transpose to (in_ch, out_ch), bf16
        return params[name].T.astype(bf)

    # Fused q/k/v projection weights / biases per modality.
    rwqkv = jnp.concatenate([w_t("rwq"), w_t("rwk"), w_t("rwv")], axis=1)   # (C, 3C)
    fwqkv = jnp.concatenate([w_t("fwq"), w_t("fwk"), w_t("fwv")], axis=1)
    bqkv = jnp.stack([
        jnp.concatenate([params["rbq"], params["rbk"], params["rbv"]]),
        jnp.concatenate([params["fbq"], params["fbk"], params["fbv"]]),
    ], axis=0).astype(jnp.float32)                                          # (2, 3C)
    brest = jnp.stack([params[k].reshape(C) for k in
                       ("rbr", "fbr", "b1", "b2", "lng", "lnb")],
                      axis=0).astype(jnp.float32)                           # (6, C)

    # Final linear, lane-padded to a 128 multiple.
    wl_pad = jnp.pad(params["wl"].T, ((0, 0), (0, clsp - class_nb))).astype(bf)
    bl_pad = jnp.pad(params["bl"].reshape(1, class_nb),
                     ((0, 0), (0, clsp - class_nb))).astype(jnp.float32)

    # Host-precomputed block-diagonal head mask and its rank-H one-hot factorization.
    head_of = (jnp.arange(C) // hd).astype(jnp.int32)
    m1 = jax.nn.one_hot(head_of, n_heads, dtype=bf)                         # (C, H)
    m2 = m1.T                                                               # (H, C)
    mask = (head_of[:, None] == head_of[None, :]).astype(bf)                # (C, C)

    feat_spec = pl.BlockSpec((1, L, C), lambda b: (b, 0, 0))    # double-buffered (default)

    def inv(shape):      # grid-invariant -> single-buffered, resident once
        return pl.BlockSpec(shape, lambda b, _s=shape: (0,) * len(_s),
                            pipeline_mode=pl.Buffered(1))

    in_specs = [
        feat_spec, feat_spec,
        inv((C, 3 * C)), inv((C, 3 * C)),                   # rwqkv, fwqkv
        inv((C, C)), inv((C, C)), inv((C, C)), inv((C, C)),  # rwr, fwr, w1, w2
        inv((C, clsp)),                                      # wl
        inv((C, C)),                                         # head mask
        inv((C, n_heads)), inv((n_heads, C)),                # m1, m2
        inv((2, 3 * C)), inv((6, C)), inv((1, clsp)),        # bias packs, bl
    ]

    # Advisory cost so XLA can overlap this call with surrounding backbone work.
    flops = 2 * N * L * C * C * 14 + 4 * N * L * C * n_heads + 2 * N * C * clsp
    cost = pl.CostEstimate(
        flops=int(flops),
        transcendentals=int(N * (4 * L * C + L)),
        bytes_accessed=int(2 * N * L * C * 2 + (2 * 3 + 4 + 1) * C * C * 2
                           + C * clsp * 2 + (2 * 3 + 6) * C * 4 + N * clsp * 4),
    )

    # TODO(synk): for latency-sensitive small-N serving, prefetch the grid-invariant
    #             weight set in a prior pallas_call (cross-call future) so its ~20 MiB
    #             HBM DMA overlaps the backbone instead of preceding grid step 0.
    out = pl.pallas_call(
        fusion_head_kernel,
        out_shape=jax.ShapeDtypeStruct((N, 1, clsp), jnp.float32),
        grid_spec=pltpu.PrefetchScalarGridSpec(
            num_scalar_prefetch=0,
            grid=(N,),
            in_specs=in_specs,
            out_specs=pl.BlockSpec((1, 1, clsp), lambda b: (b, 0, 0)),
        ),
        compiler_params=pltpu.CompilerParams(
            # TODO(synk): on v7x with N==1, split rgb/flow (grid=(N,2)) or L across the
            #             two TensorCores so the second core / its VMEM is not idle.
            dimension_semantics=("parallel",),
            # Production budget (C=1024): ~22 MiB single-buffered bf16 weights + ~3 MiB
            # bf16 double-buffered features + ~15 MiB live intermediates -> fits v7x's
            # 64 MiB physical VMEM with headroom.
            vmem_limit_bytes=40 * 1024 * 1024,
        ),
        cost_estimate=cost,
    )(xr, xf, rwqkv, fwqkv, w_t("rwr"), w_t("fwr"), w_t("w1"), w_t("w2"),
      wl_pad, mask, m1, m2, bqkv, brest, bl_pad)

    return out[:, 0, :class_nb]


# -----------------------------------------------------------------------------
# pure-JAX reference in the original PyTorch (C, L) orientation, per-head loop.
# Matmul operands cast to bf16 like the kernel (f32 accumulation); features are
# quantized to bf16 up front exactly as the kernel's input tiles are.
# -----------------------------------------------------------------------------
def _reference(x_rgb, x_flow, p, n_heads):
    bf = jnp.bfloat16

    def dot32(a, b):
        return jnp.dot(a.astype(bf), b.astype(bf), preferred_element_type=jnp.float32)

    def attention(x, wq, bq, wk, bk, wv, bv, wr, br):
        C = x.shape[0]
        hd = C // n_heads
        q = dot32(wq, x) + bq[:, None]
        k = dot32(wk, x) + bk[:, None]
        v = dot32(wv, x) + bv[:, None]
        heads = []
        for h in range(n_heads):
            kh = k[h * hd:(h + 1) * hd]
            qh = q[h * hd:(h + 1) * hd]
            vh = v[h * hd:(h + 1) * hd]
            key = jax.nn.softmax(kh, axis=1)        # over spatial (torch dim=2)
            query = jax.nn.softmax(qh, axis=0)      # over channels (torch dim=1)
            context = dot32(key, vh.T)              # (hd, hd)
            attended = dot32(context.T, query)      # (hd, L)
            heads.append(attended)
        agg = jnp.concatenate(heads, axis=0)
        return dot32(wr, agg) + br[:, None] + x

    def ffn(a):
        h = jnp.maximum(dot32(p["w1"], a) + p["b1"][:, None], 0.0)
        f = dot32(p["w2"], h) + p["b2"][:, None]
        y = f + a
        mu = jnp.mean(y, axis=0, keepdims=True)
        var = jnp.mean((y - mu) ** 2, axis=0, keepdims=True)
        yn = (y - mu) * jax.lax.rsqrt(var + 1e-5)
        return yn * p["lng"][:, None] + p["lnb"][:, None]

    def one(xr, xf):
        xr = xr.astype(bf).astype(jnp.float32)      # match the kernel's bf16 feature tiles
        xf = xf.astype(bf).astype(jnp.float32)
        ro = attention(xr, p["rwq"], p["rbq"], p["rwk"], p["rbk"],
                       p["rwv"], p["rbv"], p["rwr"], p["rbr"])
        fo = attention(xf, p["fwq"], p["fbq"], p["fwk"], p["fbk"],
                       p["fwv"], p["fbv"], p["fwr"], p["fbr"])
        y = ffn(ro + fo)
        pooled = jnp.mean(y, axis=1)                # (C,)
        return dot32(p["wl"], pooled[:, None])[:, 0] + p["bl"]

    return jax.vmap(one)(x_rgb, x_flow)


# -----------------------------------------------------------------------------
# main
# -----------------------------------------------------------------------------
if __name__ == "__main__":
    # Small shapes consistent with the module (production: C=1024, n_heads=16,
    # class_nb=101, L = T*7*7 of the mixed_5c feature map).
    N, C, T, H, W = 2, 32, 3, 4, 4
    L = T * H * W                                   # 48 (!= C, catches layout bugs)
    N_HEADS = 4
    CLASS_NB = 8

    key = jax.random.PRNGKey(0)
    ks = jax.random.split(key, 32)

    def mat(k):
        return jax.random.normal(k, (C, C), jnp.float32) * 0.05

    def vec(k):
        return jax.random.normal(k, (C,), jnp.float32) * 0.05

    params = {
        # rgb EfficientAttention (queries / keys / values / reprojection 1x1 convs)
        "rwq": mat(ks[0]), "rbq": vec(ks[1]), "rwk": mat(ks[2]), "rbk": vec(ks[3]),
        "rwv": mat(ks[4]), "rbv": vec(ks[5]), "rwr": mat(ks[6]), "rbr": vec(ks[7]),
        # flow EfficientAttention
        "fwq": mat(ks[8]), "fbq": vec(ks[9]), "fwk": mat(ks[10]), "fbk": vec(ks[11]),
        "fwv": mat(ks[12]), "fbv": vec(ks[13]), "fwr": mat(ks[14]), "fbr": vec(ks[15]),
        # FeedForwardNet
        "w1": mat(ks[16]), "b1": vec(ks[17]), "w2": mat(ks[18]), "b2": vec(ks[19]),
        "lng": jnp.ones((C,), jnp.float32), "lnb": jnp.zeros((C,), jnp.float32),
        # final nn.Linear(1024, class_nb)
        "wl": jax.random.normal(ks[20], (CLASS_NB, C), jnp.float32) * 0.05,
        "bl": jax.random.normal(ks[21], (CLASS_NB,), jnp.float32) * 0.05,
    }

    # backbone (I3D mixed_5c) features for both modalities, flattened to (N, C, L)
    x_rgb = jax.random.normal(ks[22], (N, C, T, H, W), jnp.float32).reshape(N, C, L)
    x_flow = jax.random.normal(ks[23], (N, C, T, H, W), jnp.float32).reshape(N, C, L)

    out = conv_transformer_fusion_head(x_rgb, x_flow, params, n_heads=N_HEADS)
    out = jax.block_until_ready(out)

    ref = jax.block_until_ready(_reference(x_rgb, x_flow, params, N_HEADS))
    assert out.shape == (N, CLASS_NB)
    assert bool(jnp.all(jnp.isfinite(out)))
    # bf16 matmul operands (f32 accumulation) are used in both kernel and reference.
    assert bool(jnp.allclose(out, ref, atol=2e-3, rtol=2e-3)), (out, ref)

    print("KERNEL_OK")
</pallas_src>

<mosaic_0001>
module attributes {stable_mosaic.version = 11 : i64} {
  func.func @fusion_head_kernel(%arg0: i32, %arg1: memref<1x48x32xbf16, #tpu.memory_space<vmem>>, %arg2: memref<1x48x32xbf16, #tpu.memory_space<vmem>>, %arg3: memref<32x96xbf16, #tpu.memory_space<vmem>>, %arg4: memref<32x96xbf16, #tpu.memory_space<vmem>>, %arg5: memref<32x32xbf16, #tpu.memory_space<vmem>>, %arg6: memref<32x32xbf16, #tpu.memory_space<vmem>>, %arg7: memref<32x32xbf16, #tpu.memory_space<vmem>>, %arg8: memref<32x32xbf16, #tpu.memory_space<vmem>>, %arg9: memref<32x128xbf16, #tpu.memory_space<vmem>>, %arg10: memref<32x32xbf16, #tpu.memory_space<vmem>>, %arg11: memref<32x4xbf16, #tpu.memory_space<vmem>>, %arg12: memref<4x32xbf16, #tpu.memory_space<vmem>>, %arg13: memref<2x96xf32, #tpu.memory_space<vmem>>, %arg14: memref<6x32xf32, #tpu.memory_space<vmem>>, %arg15: memref<1x128xf32, #tpu.memory_space<vmem>>, %arg16: memref<1x1x128xf32, #tpu.memory_space<vmem>>) attributes {dimension_semantics = [#tpu.dimension_semantics<parallel>], iteration_bounds = array<i64: 2>, scalar_prefetch = 0 : i64, scratch_operands = 0 : i64, tpu.core_type = #tpu.core_type<tc>, window_params = [{transform_indices = @transform_0, window_bounds = array<i64: 1, 48, 32>}, {transform_indices = @transform_1, window_bounds = array<i64: 1, 48, 32>}, {pipeline_mode = #tpu.pipeline_mode<synchronous>, transform_indices = @transform_2, window_bounds = array<i64: 32, 96>}, {pipeline_mode = #tpu.pipeline_mode<synchronous>, transform_indices = @transform_3, window_bounds = array<i64: 32, 96>}, {pipeline_mode = #tpu.pipeline_mode<synchronous>, transform_indices = @transform_4, window_bounds = array<i64: 32, 32>}, {pipeline_mode = #tpu.pipeline_mode<synchronous>, transform_indices = @transform_5, window_bounds = array<i64: 32, 32>}, {pipeline_mode = #tpu.pipeline_mode<synchronous>, transform_indices = @transform_6, window_bounds = array<i64: 32, 32>}, {pipeline_mode = #tpu.pipeline_mode<synchronous>, transform_indices = @transform_7, window_bounds = array<i64: 32, 32>}, {pipeline_mode = #tpu.pipeline_mode<synchronous>, transform_indices = @transform_8, window_bounds = array<i64: 32, 128>}, {pipeline_mode = #tpu.pipeline_mode<synchronous>, transform_indices = @transform_9, window_bounds = array<i64: 32, 32>}, {pipeline_mode = #tpu.pipeline_mode<synchronous>, transform_indices = @transform_10, window_bounds = array<i64: 32, 4>}, {pipeline_mode = #tpu.pipeline_mode<synchronous>, transform_indices = @transform_11, window_bounds = array<i64: 4, 32>}, {pipeline_mode = #tpu.pipeline_mode<synchronous>, transform_indices = @transform_12, window_bounds = array<i64: 2, 96>}, {pipeline_mode = #tpu.pipeline_mode<synchronous>, transform_indices = @transform_13, window_bounds = array<i64: 6, 32>}, {pipeline_mode = #tpu.pipeline_mode<synchronous>, transform_indices = @transform_14, window_bounds = array<i64: 1, 128>}, {transform_indices = @transform_15, window_bounds = array<i64: 1, 1, 128>}]} {
    %c0 = arith.constant 0 : index
    %c0_0 = arith.constant 0 : index
    %0 = vector.load %arg10[%c0, %c0_0] : memref<32x32xbf16, #tpu.memory_space<vmem>>, vector<32x32xbf16>
    %c0_1 = arith.constant 0 : index
    %c0_2 = arith.constant 0 : index
    %1 = vector.load %arg11[%c0_1, %c0_2] : memref<32x4xbf16, #tpu.memory_space<vmem>>, vector<32x4xbf16>
    %c0_3 = arith.constant 0 : index
    %c0_4 = arith.constant 0 : index
    %2 = vector.load %arg12[%c0_3, %c0_4] : memref<4x32xbf16, #tpu.memory_space<vmem>>, vector<4x32xbf16>
    %c0_5 = arith.constant 0 : index
    %c0_6 = arith.constant 0 : index
    %3 = vector.load %arg13[%c0_5, %c0_6] : memref<2x96xf32, #tpu.memory_space<vmem>>, vector<2x96xf32>
    %c0_7 = arith.constant 0 : index
    %c0_8 = arith.constant 0 : index
    %4 = vector.load %arg14[%c0_7, %c0_8] : memref<6x32xf32, #tpu.memory_space<vmem>>, vector<6x32xf32>
    %c0_9 = arith.constant 0 : index
    %c0_10 = arith.constant 0 : index
    %c0_11 = arith.constant 0 : index
    %5 = vector.load %arg1[%c0_9, %c0_10, %c0_11] : memref<1x48x32xbf16, #tpu.memory_space<vmem>>, vector<1x48x32xbf16>
    %6 = vector.shape_cast %5 : vector<1x48x32xbf16> to vector<48x32xbf16>
    %7 = arith.extf %6 : vector<48x32xbf16> to vector<48x32xf32>
    %c0_12 = arith.constant 0 : index
    %c0_13 = arith.constant 0 : index
    %c0_14 = arith.constant 0 : index
    %8 = vector.load %arg2[%c0_12, %c0_13, %c0_14] : memref<1x48x32xbf16, #tpu.memory_space<vmem>>, vector<1x48x32xbf16>
    %9 = vector.shape_cast %8 : vector<1x48x32xbf16> to vector<48x32xbf16>
    %10 = arith.extf %9 : vector<48x32xbf16> to vector<48x32xf32>
    %c0_15 = arith.constant 0 : index
    %c0_16 = arith.constant 0 : index
    %11 = vector.load %arg3[%c0_15, %c0_16] : memref<32x96xbf16, #tpu.memory_space<vmem>>, vector<32x96xbf16>
    %12 = vector.extract_strided_slice %3 {offsets = [0, 0], sizes = [1, 96], strides = [1, 1]} : vector<2x96xf32> to vector<1x96xf32>
    %c0_17 = arith.constant 0 : index
    %c0_18 = arith.constant 0 : index
    %13 = vector.load %arg5[%c0_17, %c0_18] : memref<32x32xbf16, #tpu.memory_space<vmem>>, vector<32x32xbf16>
    %14 = vector.extract_strided_slice %4 {offsets = [0, 0], sizes = [1, 32], strides = [1, 1]} : vector<6x32xf32> to vector<1x32xf32>
    %15 = arith.truncf %7 : vector<48x32xf32> to vector<48x32xbf16>
    %cst = arith.constant dense<0.000000e+00> : vector<48x96xf32>
    %16 = tpu.matmul %15, %11, %cst {dimension_numbers = #tpu.dot_dimension_numbers<[1], [0], [0], [1], [0, 0, 1, 1], [], []>} : vector<48x32xbf16>, vector<32x96xbf16>, vector<48x96xf32> -> vector<48x96xf32>
    %17 = vector.broadcast %12 : vector<1x96xf32> to vector<48x96xf32>
    %18 = arith.addf %16, %17 : vector<48x96xf32>
    %19 = vector.extract_strided_slice %18 {offsets = [0, 0], sizes = [48, 32], strides = [1, 1]} : vector<48x96xf32> to vector<48x32xf32>
    %20 = vector.extract_strided_slice %18 {offsets = [0, 32], sizes = [48, 32], strides = [1, 1]} : vector<48x96xf32> to vector<48x32xf32>
    %21 = vector.extract_strided_slice %18 {offsets = [0, 64], sizes = [48, 32], strides = [1, 1]} : vector<48x96xf32> to vector<48x32xf32>
    %cst_19 = arith.constant dense<0xFF800000> : vector<32xf32>
    %22 = vector.multi_reduction <maximumf>, %20, %cst_19 [0] : vector<48x32xf32> to vector<32xf32>
    %23 = vector.shape_cast %22 : vector<32xf32> to vector<1x32xf32>
    %24 = vector.broadcast %23 : vector<1x32xf32> to vector<48x32xf32>
    %25 = arith.subf %20, %24 : vector<48x32xf32>
    %26 = math.exp %25 : vector<48x32xf32>
    %cst_20 = arith.constant dense<0.000000e+00> : vector<32xf32>
    %27 = vector.multi_reduction <add>, %26, %cst_20 [0] : vector<48x32xf32> to vector<32xf32>
    %28 = vector.shape_cast %27 : vector<32xf32> to vector<1x32xf32>
    %29 = tpu.reciprocal %28 {approx = true} : vector<1x32xf32> -> vector<1x32xf32>
    %30 = vector.broadcast %29 : vector<1x32xf32> to vector<48x32xf32>
    %31 = arith.mulf %26, %30 : vector<48x32xf32>
    %cst_21 = arith.constant dense<0xFF800000> : vector<48xf32>
    %32 = vector.multi_reduction <maximumf>, %19, %cst_21 [1] : vector<48x32xf32> to vector<48xf32>
    %33 = vector.shape_cast %32 : vector<48xf32> to vector<48x1xf32>
    %34 = vector.broadcast %33 : vector<48x1xf32> to vector<48x32xf32>
    %35 = arith.subf %19, %34 : vector<48x32xf32>
    %36 = math.exp %35 : vector<48x32xf32>
    %37 = arith.truncf %36 : vector<48x32xf32> to vector<48x32xbf16>
    %cst_22 = arith.constant dense<0.000000e+00> : vector<48x4xf32>
    %38 = tpu.matmul %37, %1, %cst_22 {dimension_numbers = #tpu.dot_dimension_numbers<[1], [0], [0], [1], [0, 0, 1, 1], [], []>} : vector<48x32xbf16>, vector<32x4xbf16>, vector<48x4xf32> -> vector<48x4xf32>
    %39 = arith.truncf %38 : vector<48x4xf32> to vector<48x4xbf16>
    %cst_23 = arith.constant dense<0.000000e+00> : vector<48x32xf32>
    %40 = tpu.matmul %39, %2, %cst_23 {dimension_numbers = #tpu.dot_dimension_numbers<[1], [0], [0], [1], [0, 0, 1, 1], [], []>} : vector<48x4xbf16>, vector<4x32xbf16>, vector<48x32xf32> -> vector<48x32xf32>
    %cst_24 = arith.constant 9.99999968E-21 : f32
    %41 = vector.broadcast %cst_24 : f32 to vector<48x32xf32>
    %42 = arith.maximumf %40, %41 : vector<48x32xf32>
    %43 = tpu.reciprocal %42 {approx = true} : vector<48x32xf32> -> vector<48x32xf32>
    %44 = arith.mulf %36, %43 : vector<48x32xf32>
    %45 = arith.truncf %31 : vector<48x32xf32> to vector<48x32xbf16>
    %46 = arith.truncf %21 : vector<48x32xf32> to vector<48x32xbf16>
    %cst_25 = arith.constant dense<0.000000e+00> : vector<32x32xf32>
    %47 = tpu.matmul %45, %46, %cst_25 {dimension_numbers = #tpu.dot_dimension_numbers<[0], [0], [1], [1], [0, 1, 1, 1], [], []>} : vector<48x32xbf16>, vector<48x32xbf16>, vector<32x32xf32> -> vector<32x32xf32>
    %48 = arith.truncf %47 : vector<32x32xf32> to vector<32x32xbf16>
    %49 = arith.mulf %48, %0 : vector<32x32xbf16>
    %50 = arith.truncf %44 : vector<48x32xf32> to vector<48x32xbf16>
    %cst_26 = arith.constant dense<0.000000e+00> : vector<48x32xf32>
    %51 = tpu.matmul %50, %49, %cst_26 {dimension_numbers = #tpu.dot_dimension_numbers<[1], [0], [0], [1], [0, 0, 1, 1], [], []>} : vector<48x32xbf16>, vector<32x32xbf16>, vector<48x32xf32> -> vector<48x32xf32>
    %52 = arith.truncf %51 : vector<48x32xf32> to vector<48x32xbf16>
    %cst_27 = arith.constant dense<0.000000e+00> : vector<48x32xf32>
    %53 = tpu.matmul %52, %13, %cst_27 {dimension_numbers = #tpu.dot_dimension_numbers<[1], [0], [0], [1], [0, 0, 1, 1], [], []>} : vector<48x32xbf16>, vector<32x32xbf16>, vector<48x32xf32> -> vector<48x32xf32>
    %54 = vector.broadcast %14 : vector<1x32xf32> to vector<48x32xf32>
    %55 = arith.addf %53, %54 : vector<48x32xf32>
    %56 = arith.addf %55, %7 : vector<48x32xf32>
    %c0_28 = arith.constant 0 : index
    %c0_29 = arith.constant 0 : index
    %57 = vector.load %arg4[%c0_28, %c0_29] : memref<32x96xbf16, #tpu.memory_space<vmem>>, vector<32x96xbf16>
    %58 = vector.extract_strided_slice %3 {offsets = [1, 0], sizes = [1, 96], strides = [1, 1]} : vector<2x96xf32> to vector<1x96xf32>
    %c0_30 = arith.constant 0 : index
    %c0_31 = arith.constant 0 : index
    %59 = vector.load %arg6[%c0_30, %c0_31] : memref<32x32xbf16, #tpu.memory_space<vmem>>, vector<32x32xbf16>
    %60 = vector.extract_strided_slice %4 {offsets = [1, 0], sizes = [1, 32], strides = [1, 1]} : vector<6x32xf32> to vector<1x32xf32>
    %61 = arith.truncf %10 : vector<48x32xf32> to vector<48x32xbf16>
    %cst_32 = arith.constant dense<0.000000e+00> : vector<48x96xf32>
    %62 = tpu.matmul %61, %57, %cst_32 {dimension_numbers = #tpu.dot_dimension_numbers<[1], [0], [0], [1], [0, 0, 1, 1], [], []>} : vector<48x32xbf16>, vector<32x96xbf16>, vector<48x96xf32> -> vector<48x96xf32>
    %63 = vector.broadcast %58 : vector<1x96xf32> to vector<48x96xf32>
    %64 = arith.addf %62, %63 : vector<48x96xf32>
    %65 = vector.extract_strided_slice %64 {offsets = [0, 0], sizes = [48, 32], strides = [1, 1]} : vector<48x96xf32> to vector<48x32xf32>
    %66 = vector.extract_strided_slice %64 {offsets = [0, 32], sizes = [48, 32], strides = [1, 1]} : vector<48x96xf32> to vector<48x32xf32>
    %67 = vector.extract_strided_slice %64 {offsets = [0, 64], sizes = [48, 32], strides = [1, 1]} : vector<48x96xf32> to vector<48x32xf32>
    %cst_33 = arith.constant dense<0xFF800000> : vector<32xf32>
    %68 = vector.multi_reduction <maximumf>, %66, %cst_33 [0] : vector<48x32xf32> to vector<32xf32>
    %69 = vector.shape_cast %68 : vector<32xf32> to vector<1x32xf32>
    %70 = vector.broadcast %69 : vector<1x32xf32> to vector<48x32xf32>
    %71 = arith.subf %66, %70 : vector<48x32xf32>
    %72 = math.exp %71 : vector<48x32xf32>
    %cst_34 = arith.constant dense<0.000000e+00> : vector<32xf32>
    %73 = vector.multi_reduction <add>, %72, %cst_34 [0] : vector<48x32xf32> to vector<32xf32>
    %74 = vector.shape_cast %73 : vector<32xf32> to vector<1x32xf32>
    %75 = tpu.reciprocal %74 {approx = true} : vector<1x32xf32> -> vector<1x32xf32>
    %76 = vector.broadcast %75 : vector<1x32xf32> to vector<48x32xf32>
    %77 = arith.mulf %72, %76 : vector<48x32xf32>
    %cst_35 = arith.constant dense<0xFF800000> : vector<48xf32>
    %78 = vector.multi_reduction <maximumf>, %65, %cst_35 [1] : vector<48x32xf32> to vector<48xf32>
    %79 = vector.shape_cast %78 : vector<48xf32> to vector<48x1xf32>
    %80 = vector.broadcast %79 : vector<48x1xf32> to vector<48x32xf32>
    %81 = arith.subf %65, %80 : vector<48x32xf32>
    %82 = math.exp %81 : vector<48x32xf32>
    %83 = arith.truncf %82 : vector<48x32xf32> to vector<48x32xbf16>
    %cst_36 = arith.constant dense<0.000000e+00> : vector<48x4xf32>
    %84 = tpu.matmul %83, %1, %cst_36 {dimension_numbers = #tpu.dot_dimension_numbers<[1], [0], [0], [1], [0, 0, 1, 1], [], []>} : vector<48x32xbf16>, vector<32x4xbf16>, vector<48x4xf32> -> vector<48x4xf32>
    %85 = arith.truncf %84 : vector<48x4xf32> to vector<48x4xbf16>
    %cst_37 = arith.constant dense<0.000000e+00> : vector<48x32xf32>
    %86 = tpu.matmul %85, %2, %cst_37 {dimension_numbers = #tpu.dot_dimension_numbers<[1], [0], [0], [1], [0, 0, 1, 1], [], []>} : vector<48x4xbf16>, vector<4x32xbf16>, vector<48x32xf32> -> vector<48x32xf32>
    %cst_38 = arith.constant 9.99999968E-21 : f32
    %87 = vector.broadcast %cst_38 : f32 to vector<48x32xf32>
    %88 = arith.maximumf %86, %87 : vector<48x32xf32>
    %89 = tpu.reciprocal %88 {approx = true} : vector<48x32xf32> -> vector<48x32xf32>
    %90 = arith.mulf %82, %89 : vector<48x32xf32>
    %91 = arith.truncf %77 : vector<48x32xf32> to vector<48x32xbf16>
    %92 = arith.truncf %67 : vector<48x32xf32> to vector<48x32xbf16>
    %cst_39 = arith.constant dense<0.000000e+00> : vector<32x32xf32>
    %93 = tpu.matmul %91, %92, %cst_39 {dimension_numbers = #tpu.dot_dimension_numbers<[0], [0], [1], [1], [0, 1, 1, 1], [], []>} : vector<48x32xbf16>, vector<48x32xbf16>, vector<32x32xf32> -> vector<32x32xf32>
    %94 = arith.truncf %93 : vector<32x32xf32> to vector<32x32xbf16>
    %95 = arith.mulf %94, %0 : vector<32x32xbf16>
    %96 = arith.truncf %90 : vector<48x32xf32> to vector<48x32xbf16>
    %cst_40 = arith.constant dense<0.000000e+00> : vector<48x32xf32>
    %97 = tpu.matmul %96, %95, %cst_40 {dimension_numbers = #tpu.dot_dimension_numbers<[1], [0], [0], [1], [0, 0, 1, 1], [], []>} : vector<48x32xbf16>, vector<32x32xbf16>, vector<48x32xf32> -> vector<48x32xf32>
    %98 = arith.truncf %97 : vector<48x32xf32> to vector<48x32xbf16>
    %cst_41 = arith.constant dense<0.000000e+00> : vector<48x32xf32>
    %99 = tpu.matmul %98, %59, %cst_41 {dimension_numbers = #tpu.dot_dimension_numbers<[1], [0], [0], [1], [0, 0, 1, 1], [], []>} : vector<48x32xbf16>, vector<32x32xbf16>, vector<48x32xf32> -> vector<48x32xf32>
    %100 = vector.broadcast %60 : vector<1x32xf32> to vector<48x32xf32>
    %101 = arith.addf %99, %100 : vector<48x32xf32>
    %102 = arith.addf %101, %10 : vector<48x32xf32>
    %103 = arith.addf %56, %102 : vector<48x32xf32>
    %c0_42 = arith.constant 0 : index
    %c0_43 = arith.constant 0 : index
    %104 = vector.load %arg7[%c0_42, %c0_43] : memref<32x32xbf16, #tpu.memory_space<vmem>>, vector<32x32xbf16>
    %105 = vector.extract_strided_slice %4 {offsets = [2, 0], sizes = [1, 32], strides = [1, 1]} : vector<6x32xf32> to vector<1x32xf32>
    %c0_44 = arith.constant 0 : index
    %c0_45 = arith.constant 0 : index
    %106 = vector.load %arg8[%c0_44, %c0_45] : memref<32x32xbf16, #tpu.memory_space<vmem>>, vector<32x32xbf16>
    %107 = vector.extract_strided_slice %4 {offsets = [3, 0], sizes = [1, 32], strides = [1, 1]} : vector<6x32xf32> to vector<1x32xf32>
    %108 = vector.extract_strided_slice %4 {offsets = [4, 0], sizes = [1, 32], strides = [1, 1]} : vector<6x32xf32> to vector<1x32xf32>
    %109 = vector.extract_strided_slice %4 {offsets = [5, 0], sizes = [1, 32], strides = [1, 1]} : vector<6x32xf32> to vector<1x32xf32>
    %110 = arith.truncf %103 : vector<48x32xf32> to vector<48x32xbf16>
    %cst_46 = arith.constant dense<0.000000e+00> : vector<48x32xf32>
    %111 = tpu.matmul %110, %104, %cst_46 {dimension_numbers = #tpu.dot_dimension_numbers<[1], [0], [0], [1], [0, 0, 1, 1], [], []>} : vector<48x32xbf16>, vector<32x32xbf16>, vector<48x32xf32> -> vector<48x32xf32>
    %112 = vector.broadcast %105 : vector<1x32xf32> to vector<48x32xf32>
    %113 = arith.addf %111, %112 : vector<48x32xf32>
    %cst_47 = arith.constant 0.000000e+00 : f32
    %114 = vector.broadcast %cst_47 : f32 to vector<48x32xf32>
    %115 = arith.maximumf %113, %114 : vector<48x32xf32>
    %116 = arith.truncf %115 : vector<48x32xf32> to vector<48x32xbf16>
    %cst_48 = arith.constant dense<0.000000e+00> : vector<48x32xf32>
    %117 = tpu.matmul %116, %106, %cst_48 {dimension_numbers = #tpu.dot_dimension_numbers<[1], [0], [0], [1], [0, 0, 1, 1], [], []>} : vector<48x32xbf16>, vector<32x32xbf16>, vector<48x32xf32> -> vector<48x32xf32>
    %118 = vector.broadcast %107 : vector<1x32xf32> to vector<48x32xf32>
    %119 = arith.addf %117, %118 : vector<48x32xf32>
    %120 = arith.addf %119, %103 : vector<48x32xf32>
    %cst_49 = arith.constant dense<0.000000e+00> : vector<48xf32>
    %121 = vector.multi_reduction <add>, %120, %cst_49 [1] : vector<48x32xf32> to vector<48xf32>
    %122 = vector.shape_cast %121 : vector<48xf32> to vector<48x1xf32>
    %cst_50 = arith.constant 3.200000e+01 : f32
    %123 = vector.broadcast %cst_50 : f32 to vector<48x1xf32>
    %124 = arith.divf %122, %123 : vector<48x1xf32>
    %125 = vector.broadcast %124 : vector<48x1xf32> to vector<48x32xf32>
    %126 = arith.subf %120, %125 : vector<48x32xf32>
    %127 = arith.mulf %126, %126 : vector<48x32xf32>
    %cst_51 = arith.constant dense<0.000000e+00> : vector<48xf32>
    %128 = vector.multi_reduction <add>, %127, %cst_51 [1] : vector<48x32xf32> to vector<48xf32>
    %129 = vector.shape_cast %128 : vector<48xf32> to vector<48x1xf32>
    %cst_52 = arith.constant 3.200000e+01 : f32
    %130 = vector.broadcast %cst_52 : f32 to vector<48x1xf32>
    %131 = arith.divf %129, %130 : vector<48x1xf32>
    %132 = vector.broadcast %124 : vector<48x1xf32> to vector<48x32xf32>
    %133 = arith.subf %120, %132 : vector<48x32xf32>
    %cst_53 = arith.constant 9.99999974E-6 : f32
    %134 = vector.broadcast %cst_53 : f32 to vector<48x1xf32>
    %135 = arith.addf %131, %134 : vector<48x1xf32>
    %136 = math.rsqrt %135 : vector<48x1xf32>
    %137 = vector.broadcast %136 : vector<48x1xf32> to vector<48x32xf32>
    %138 = arith.mulf %133, %137 : vector<48x32xf32>
    %139 = vector.broadcast %108 : vector<1x32xf32> to vector<48x32xf32>
    %140 = arith.mulf %138, %139 : vector<48x32xf32>
    %141 = vector.broadcast %109 : vector<1x32xf32> to vector<48x32xf32>
    %142 = arith.addf %140, %141 : vector<48x32xf32>
    %cst_54 = arith.constant dense<0.000000e+00> : vector<32xf32>
    %143 = vector.multi_reduction <add>, %142, %cst_54 [0] : vector<48x32xf32> to vector<32xf32>
    %144 = vector.shape_cast %143 : vector<32xf32> to vector<1x32xf32>
    %cst_55 = arith.constant 4.800000e+01 : f32
    %145 = vector.broadcast %cst_55 : f32 to vector<1x32xf32>
    %146 = arith.divf %144, %145 : vector<1x32xf32>
    %147 = arith.truncf %146 : vector<1x32xf32> to vector<1x32xbf16>
    %c0_56 = arith.constant 0 : index
    %c0_57 = arith.constant 0 : index
    %148 = vector.load %arg9[%c0_56, %c0_57] : memref<32x128xbf16, #tpu.memory_space<vmem>>, vector<32x128xbf16>
    %cst_58 = arith.constant dense<0.000000e+00> : vector<1x128xf32>
    %149 = tpu.matmul %147, %148, %cst_58 {dimension_numbers = #tpu.dot_dimension_numbers<[1], [0], [0], [1], [0, 0, 1, 1], [], []>} : vector<1x32xbf16>, vector<32x128xbf16>, vector<1x128xf32> -> vector<1x128xf32>
    %c0_59 = arith.constant 0 : index
    %c0_60 = arith.constant 0 : index
    %150 = vector.load %arg15[%c0_59, %c0_60] : memref<1x128xf32, #tpu.memory_space<vmem>>, vector<1x128xf32>
    %151 = arith.addf %149, %150 : vector<1x128xf32>
    %c0_61 = arith.constant 0 : index
    %c0_62 = arith.constant 0 : index
    %c0_63 = arith.constant 0 : index
    %152 = vector.load %arg16[%c0_61, %c0_62, %c0_63] : memref<1x1x128xf32, #tpu.memory_space<vmem>>, vector<1x1x128xf32>
    %153 = vector.shape_cast %152 : vector<1x1x128xf32> to vector<1x128xf32>
    %154 = vector.shape_cast %151 : vector<1x128xf32> to vector<1x1x128xf32>
    tpu.vector_store %arg16[%c0_61, %c0_62, %c0_63], %154 {strides = array<i32>} : memref<1x1x128xf32, #tpu.memory_space<vmem>>, vector<1x1x128xf32>,
    return
  }
  func.func @transform_0(%arg0: i32) -> (i32, i32, i32) {
    %c0_i32 = arith.constant 0 : i32
    %c0_i32_0 = arith.constant 0 : i32
    %c0_i32_1 = arith.constant 0 : i32
    return %arg0, %c0_i32, %c0_i32_0 : i32, i32, i32
  }
  func.func @transform_1(%arg0: i32) -> (i32, i32, i32) {
    %c0_i32 = arith.constant 0 : i32
    %c0_i32_0 = arith.constant 0 : i32
    %c0_i32_1 = arith.constant 0 : i32
    return %arg0, %c0_i32, %c0_i32_0 : i32, i32, i32
  }
  func.func @transform_2(%arg0: i32) -> (i32, i32) {
    %c0_i32 = arith.constant 0 : i32
    %c0_i32_0 = arith.constant 0 : i32
    %c0_i32_1 = arith.constant 0 : i32
    return %c0_i32, %c0_i32_0 : i32, i32
  }
  func.func @transform_3(%arg0: i32) -> (i32, i32) {
    %c0_i32 = arith.constant 0 : i32
    %c0_i32_0 = arith.constant 0 : i32
    %c0_i32_1 = arith.constant 0 : i32
    return %c0_i32, %c0_i32_0 : i32, i32
  }
  func.func @transform_4(%arg0: i32) -> (i32, i32) {
    %c0_i32 = arith.constant 0 : i32
    %c0_i32_0 = arith.constant 0 : i32
    %c0_i32_1 = arith.constant 0 : i32
    return %c0_i32, %c0_i32_0 : i32, i32
  }
  func.func @transform_5(%arg0: i32) -> (i32, i32) {
    %c0_i32 = arith.constant 0 : i32
    %c0_i32_0 = arith.constant 0 : i32
    %c0_i32_1 = arith.constant 0 : i32
    return %c0_i32, %c0_i32_0 : i32, i32
  }
  func.func @transform_6(%arg0: i32) -> (i32, i32) {
    %c0_i32 = arith.constant 0 : i32
    %c0_i32_0 = arith.constant 0 : i32
    %c0_i32_1 = arith.constant 0 : i32
    return %c0_i32, %c0_i32_0 : i32, i32
  }
  func.func @transform_7(%arg0: i32) -> (i32, i32) {
    %c0_i32 = arith.constant 0 : i32
    %c0_i32_0 = arith.constant 0 : i32
    %c0_i32_1 = arith.constant 0 : i32
    return %c0_i32, %c0_i32_0 : i32, i32
  }
  func.func @transform_8(%arg0: i32) -> (i32, i32) {
    %c0_i32 = arith.constant 0 : i32
    %c0_i32_0 = arith.constant 0 : i32
    %c0_i32_1 = arith.constant 0 : i32
    return %c0_i32, %c0_i32_0 : i32, i32
  }
  func.func @transform_9(%arg0: i32) -> (i32, i32) {
    %c0_i32 = arith.constant 0 : i32
    %c0_i32_0 = arith.constant 0 : i32
    %c0_i32_1 = arith.constant 0 : i32
    return %c0_i32, %c0_i32_0 : i32, i32
  }
  func.func @transform_10(%arg0: i32) -> (i32, i32) {
    %c0_i32 = arith.constant 0 : i32
    %c0_i32_0 = arith.constant 0 : i32
    %c0_i32_1 = arith.constant 0 : i32
    return %c0_i32, %c0_i32_0 : i32, i32
  }
  func.func @transform_11(%arg0: i32) -> (i32, i32) {
    %c0_i32 = arith.constant 0 : i32
    %c0_i32_0 = arith.constant 0 : i32
    %c0_i32_1 = arith.constant 0 : i32
    return %c0_i32, %c0_i32_0 : i32, i32
  }
  func.func @transform_12(%arg0: i32) -> (i32, i32) {
    %c0_i32 = arith.constant 0 : i32
    %c0_i32_0 = arith.constant 0 : i32
    %c0_i32_1 = arith.constant 0 : i32
    return %c0_i32, %c0_i32_0 : i32, i32
  }
  func.func @transform_13(%arg0: i32) -> (i32, i32) {
    %c0_i32 = arith.constant 0 : i32
    %c0_i32_0 = arith.constant 0 : i32
    %c0_i32_1 = arith.constant 0 : i32
    return %c0_i32, %c0_i32_0 : i32, i32
  }
  func.func @transform_14(%arg0: i32) -> (i32, i32) {
    %c0_i32 = arith.constant 0 : i32
    %c0_i32_0 = arith.constant 0 : i32
    %c0_i32_1 = arith.constant 0 : i32
    return %c0_i32, %c0_i32_0 : i32, i32
  }
  func.func @transform_15(%arg0: i32) -> (i32, i32, i32) {
    %c0_i32 = arith.constant 0 : i32
    %c0_i32_0 = arith.constant 0 : i32
    %c0_i32_1 = arith.constant 0 : i32
    return %arg0, %c0_i32, %c0_i32_0 : i32, i32, i32
  }
}

</mosaic_0001>

<llo_original>
// kernel: tpu_custom_call.1
$region0: #{tpu_custom_call.1}
  #allocation0 [shape = 'u32[]', space=smem, size = 0x4, offset = 0x4, fixed_abs, tag = 'smem constant byte address 0x4 - core index']
  #allocation1 [shape = 'u32[144,128]{1,0:T(1,128)}', space=vmem, size = 0x12000, scoped, tag = 'internal scratch']
  %s0 = inlined_call_operand.vmem [shape: bf16[2,48,32], index: 0, kind: input, shape index: {}]
  %s1 = inlined_call_operand.vmem [shape: bf16[2,48,32], index: 1, kind: input, shape index: {}]
  %s2 = inlined_call_operand.vmem [shape: bf16[32,96], index: 2, kind: input, shape index: {}]
  %s3 = inlined_call_operand.vmem [shape: bf16[32,96], index: 3, kind: input, shape index: {}]
  %s4 = inlined_call_operand.vmem [shape: bf16[32,32], index: 4, kind: input, shape index: {}]
  %s5 = inlined_call_operand.vmem [shape: bf16[32,32], index: 5, kind: input, shape index: {}]
  %s6 = inlined_call_operand.vmem [shape: bf16[32,32], index: 6, kind: input, shape index: {}]
  %s7 = inlined_call_operand.vmem [shape: bf16[32,32], index: 7, kind: input, shape index: {}]
  %s8 = inlined_call_operand.vmem [shape: bf16[32,128], index: 8, kind: input, shape index: {}]
  %s9 = inlined_call_operand.vmem [shape: bf16[32,32], index: 9, kind: input, shape index: {}]
  %s10 = inlined_call_operand.vmem [shape: bf16[32,4], index: 10, kind: input, shape index: {}]
  %s11 = inlined_call_operand.vmem [shape: bf16[4,32], index: 11, kind: input, shape index: {}]
  %s12 = inlined_call_operand.vmem [shape: f32[2,96], index: 12, kind: input, shape index: {}]
  %s13 = inlined_call_operand.vmem [shape: f32[6,32], index: 13, kind: input, shape index: {}]
  %s14 = inlined_call_operand.vmem [shape: f32[1,128], index: 14, kind: input, shape index: {}]
  %s15 = inlined_call_operand.hbm [shape: f32[2,1,128], index: 15, kind: output, shape index: {}]
  %s16 = sld [smem:[#allocation0]]
  $region93: #{tpu_custom_call.1} parent=0
    _
  %s18 = ssub.s32 1, %s16
  %s19 = scalar_select 0, %s18, %s16
  $region1: #{tpu_custom_call.1} parent=0
    #allocation2 [shape = 'u8[1024]{0}', space=vmem, size = 0x400, scoped, tag = 'output window, operand 0']
    #allocation3 [shape = 's32[2]{0}', space=sflag, size = 0x8, scoped, tag = 'scoped memory for tpu_custom_call.1']
    %20 = vsyncpa [#allocation3], 0
    %s21 = scalar_lea.sflag [#allocation3], 1
    %22 = vsyncpa %s21, 0
    loop: start=0, step=1, limit=4
    $region2: #{tpu_custom_call.1} parent=1 // loop_pre_header
      _
    $region3: #{tpu_custom_call.1} parent=1 // loop_header
      %s24 = sphi 0, %s28
      %p25 = scmp.ge.s32.totalorder %s24, 4
      %s34 = sphi 0, %s36
      %s37 = sphi 0, %s34
      %s38 = sphi 0, %s37
      %s54 = sphi 0, %s38
      %s60 = sphi 0, %s62
      %s63 = sphi 0, %s60
      %s64 = sphi 0, %s63
      %s80 = sphi 0, %s64
      %s84 = sphi 0, %s84
      %s86 = sphi 0, %s84
      %s87 = sphi 0, %s86
      %s101 = sphi 0, %s87
      %s105 = sphi 0, %s105
      %s107 = sphi 0, %s105
      %s108 = sphi 0, %s107
      %s122 = sphi 0, %s108
      %s126 = sphi 0, %s126
      %s128 = sphi 0, %s126
      %s129 = sphi 0, %s128
      %s143 = sphi 0, %s129
      %s147 = sphi 0, %s147
      %s149 = sphi 0, %s147
      %s150 = sphi 0, %s149
      %s164 = sphi 0, %s150
      %s168 = sphi 0, %s168
      %s170 = sphi 0, %s168
      %s171 = sphi 0, %s170
      %s185 = sphi 0, %s171
      %s189 = sphi 0, %s189
      %s191 = sphi 0, %s189
      %s192 = sphi 0, %s191
      %s206 = sphi 0, %s192
      %s210 = sphi 0, %s210
      %s212 = sphi 0, %s210
      %s213 = sphi 0, %s212
      %s227 = sphi 0, %s213
      %s231 = sphi 0, %s231
      %s233 = sphi 0, %s231
      %s234 = sphi 0, %s233
      %s248 = sphi 0, %s234
      %s252 = sphi 0, %s252
      %s254 = sphi 0, %s252
      %s255 = sphi 0, %s254
      %s269 = sphi 0, %s255
      %s273 = sphi 0, %s273
      %s275 = sphi 0, %s273
      %s276 = sphi 0, %s275
      %s290 = sphi 0, %s276
      %s294 = sphi 0, %s294
      %s296 = sphi 0, %s294
      %s297 = sphi 0, %s296
      %s311 = sphi 0, %s297
      %s315 = sphi 0, %s315
      %s317 = sphi 0, %s315
      %s318 = sphi 0, %s317
      %s332 = sphi 0, %s318
      %s336 = sphi 0, %s336
      %s338 = sphi 0, %s336
      %s339 = sphi 0, %s338
      %s353 = sphi 0, %s339
      %s359 = sphi 0, %s361
      %s362 = sphi 0, %s359
      %s363 = sphi 0, %s362
      %s379 = sphi 0, %s363
    $region4: #{tpu_custom_call.1} parent=1 // loop_header_branch
      %27 = sbr.rel (%p25) target = $region8
    $region5: #{tpu_custom_call.1} parent=1 // loop_body
      %s29 = ssub.s32 %s24, 1
      %s30 = ssub.s32 %s24, 2
      %s31 = sadd.s32 %s24, 1
      %s32 = ssub.s32 %s24, %s31
      %p33 = scmp.eq.s32.totalorder %s32, 0
      %s35 = sadd.s32 %s34, 1
      %s36 = scalar_select %p33, %s34, %s35
      %p39 = pneg %p33
      %p40 = scmp.eq.s32.totalorder %s24, 1
      %p41 = por %p39, %p40
      %p42 = scmp.ne.s32.totalorder %s34, %s37
      %p43 = scmp.eq.s32.totalorder %s24, 0
      %p44 = por %p42, %p43
      %p45 = scmp.ne.s32.totalorder %s34, %s37
      %p46 = scmp.eq.s32.totalorder %s29, 1
      %p47 = por %p45, %p46
      %p48 = scmp.ne.s32.totalorder %s37, %s38
      %p49 = scmp.eq.s32.totalorder %s29, 0
      %p50 = por %p48, %p49
      %p51 = scmp.ne.s32.totalorder %s37, %s38
      %p52 = scmp.eq.s32.totalorder %s30, 1
      %p53 = por %p51, %p52
      %p55 = scmp.ne.s32.totalorder %s38, %s54
      %p56 = scmp.eq.s32.totalorder %s30, 0
      %p57 = por %p55, %p56
      %s58 = ssub.s32 %s24, %s31
      %p59 = scmp.eq.s32.totalorder %s58, 0
      %s61 = sadd.s32 %s60, 1
      %s62 = scalar_select %p59, %s60, %s61
      %p65 = pneg %p59
      %p66 = scmp.eq.s32.totalorder %s24, 1
      %p67 = por %p65, %p66
      %p68 = scmp.ne.s32.totalorder %s60, %s63
      %p69 = scmp.eq.s32.totalorder %s24, 0
      %p70 = por %p68, %p69
      %p71 = scmp.ne.s32.totalorder %s60, %s63
      %p72 = scmp.eq.s32.totalorder %s29, 1
      %p73 = por %p71, %p72
      %p74 = scmp.ne.s32.totalorder %s63, %s64
      %p75 = scmp.eq.s32.totalorder %s29, 0
      %p76 = por %p74, %p75
      %p77 = scmp.ne.s32.totalorder %s63, %s64
      %p78 = scmp.eq.s32.totalorder %s30, 1
      %p79 = por %p77, %p78
      %p81 = scmp.ne.s32.totalorder %s64, %s80
      %p82 = scmp.eq.s32.totalorder %s30, 0
      %p83 = por %p81, %p82
      %s85 = sadd.s32 %s84, 1
      %p88 = scmp.eq.s32.totalorder %s24, 1
      %p89 = scmp.ne.s32.totalorder %s84, %s86
      %p90 = scmp.eq.s32.totalorder %s24, 0
      %p91 = por %p89, %p90
      %p92 = scmp.ne.s32.totalorder %s84, %s86
      %p93 = scmp.eq.s32.totalorder %s29, 1
      %p94 = por %p92, %p93
      %p95 = scmp.ne.s32.totalorder %s86, %s87
      %p96 = scmp.eq.s32.totalorder %s29, 0
      %p97 = por %p95, %p96
      %p98 = scmp.ne.s32.totalorder %s86, %s87
      %p99 = scmp.eq.s32.totalorder %s30, 1
      %p100 = por %p98, %p99
      %p102 = scmp.ne.s32.totalorder %s87, %s101
      %p103 = scmp.eq.s32.totalorder %s30, 0
      %p104 = por %p102, %p103
      %s106 = sadd.s32 %s105, 1
      %p109 = scmp.eq.s32.totalorder %s24, 1
      %p110 = scmp.ne.s32.totalorder %s105, %s107
      %p111 = scmp.eq.s32.totalorder %s24, 0
      %p112 = por %p110, %p111
      %p113 = scmp.ne.s32.totalorder %s105, %s107
      %p114 = scmp.eq.s32.totalorder %s29, 1
      %p115 = por %p113, %p114
      %p116 = scmp.ne.s32.totalorder %s107, %s108
      %p117 = scmp.eq.s32.totalorder %s29, 0
      %p118 = por %p116, %p117
      %p119 = scmp.ne.s32.totalorder %s107, %s108
      %p120 = scmp.eq.s32.totalorder %s30, 1
      %p121 = por %p119, %p120
      %p123 = scmp.ne.s32.totalorder %s108, %s122
      %p124 = scmp.eq.s32.totalorder %s30, 0
      %p125 = por %p123, %p124
      %s127 = sadd.s32 %s126, 1
      %p130 = scmp.eq.s32.totalorder %s24, 1
      %p131 = scmp.ne.s32.totalorder %s126, %s128
      %p132 = scmp.eq.s32.totalorder %s24, 0
      %p133 = por %p131, %p132
      %p134 = scmp.ne.s32.totalorder %s126, %s128
      %p135 = scmp.eq.s32.totalorder %s29, 1
      %p136 = por %p134, %p135
      %p137 = scmp.ne.s32.totalorder %s128, %s129
      %p138 = scmp.eq.s32.totalorder %s29, 0
      %p139 = por %p137, %p138
      %p140 = scmp.ne.s32.totalorder %s128, %s129
      %p141 = scmp.eq.s32.totalorder %s30, 1
      %p142 = por %p140, %p141
      %p144 = scmp.ne.s32.totalorder %s129, %s143
      %p145 = scmp.eq.s32.totalorder %s30, 0
      %p146 = por %p144, %p145
      %s148 = sadd.s32 %s147, 1
      %p151 = scmp.eq.s32.totalorder %s24, 1
      %p152 = scmp.ne.s32.totalorder %s147, %s149
      %p153 = scmp.eq.s32.totalorder %s24, 0
      %p154 = por %p152, %p153
      %p155 = scmp.ne.s32.totalorder %s147, %s149
      %p156 = scmp.eq.s32.totalorder %s29, 1
      %p157 = por %p155, %p156
      %p158 = scmp.ne.s32.totalorder %s149, %s150
      %p159 = scmp.eq.s32.totalorder %s29, 0
      %p160 = por %p158, %p159
      %p161 = scmp.ne.s32.totalorder %s149, %s150
      %p162 = scmp.eq.s32.totalorder %s30, 1
      %p163 = por %p161, %p162
      %p165 = scmp.ne.s32.totalorder %s150, %s164
      %p166 = scmp.eq.s32.totalorder %s30, 0
      %p167 = por %p165, %p166
      %s169 = sadd.s32 %s168, 1
      %p172 = scmp.eq.s32.totalorder %s24, 1
      %p173 = scmp.ne.s32.totalorder %s168, %s170
      %p174 = scmp.eq.s32.totalorder %s24, 0
      %p175 = por %p173, %p174
      %p176 = scmp.ne.s32.totalorder %s168, %s170
      %p177 = scmp.eq.s32.totalorder %s29, 1
      %p178 = por %p176, %p177
      %p179 = scmp.ne.s32.totalorder %s170, %s171
      %p180 = scmp.eq.s32.totalorder %s29, 0
      %p181 = por %p179, %p180
      %p182 = scmp.ne.s32.totalorder %s170, %s171
      %p183 = scmp.eq.s32.totalorder %s30, 1
      %p184 = por %p182, %p183
      %p186 = scmp.ne.s32.totalorder %s171, %s185
      %p187 = scmp.eq.s32.totalorder %s30, 0
      %p188 = por %p186, %p187
      %s190 = sadd.s32 %s189, 1
      %p193 = scmp.eq.s32.totalorder %s24, 1
      %p194 = scmp.ne.s32.totalorder %s189, %s191
      %p195 = scmp.eq.s32.totalorder %s24, 0
      %p196 = por %p194, %p195
      %p197 = scmp.ne.s32.totalorder %s189, %s191
      %p198 = scmp.eq.s32.totalorder %s29, 1
      %p199 = por %p197, %p198
      %p200 = scmp.ne.s32.totalorder %s191, %s192
      %p201 = scmp.eq.s32.totalorder %s29, 0
      %p202 = por %p200, %p201
      %p203 = scmp.ne.s32.totalorder %s191, %s192
      %p204 = scmp.eq.s32.totalorder %s30, 1
      %p205 = por %p203, %p204
      %p207 = scmp.ne.s32.totalorder %s192, %s206
      %p208 = scmp.eq.s32.totalorder %s30, 0
      %p209 = por %p207, %p208
      %s211 = sadd.s32 %s210, 1
      %p214 = scmp.eq.s32.totalorder %s24, 1
      %p215 = scmp.ne.s32.totalorder %s210, %s212
      %p216 = scmp.eq.s32.totalorder %s24, 0
      %p217 = por %p215, %p216
      %p218 = scmp.ne.s32.totalorder %s210, %s212
      %p219 = scmp.eq.s32.totalorder %s29, 1
      %p220 = por %p218, %p219
      %p221 = scmp.ne.s32.totalorder %s212, %s213
      %p222 = scmp.eq.s32.totalorder %s29, 0
      %p223 = por %p221, %p222
      %p224 = scmp.ne.s32.totalorder %s212, %s213
      %p225 = scmp.eq.s32.totalorder %s30, 1
      %p226 = por %p224, %p225
      %p228 = scmp.ne.s32.totalorder %s213, %s227
      %p229 = scmp.eq.s32.totalorder %s30, 0
      %p230 = por %p228, %p229
      %s232 = sadd.s32 %s231, 1
      %p235 = scmp.eq.s32.totalorder %s24, 1
      %p236 = scmp.ne.s32.totalorder %s231, %s233
      %p237 = scmp.eq.s32.totalorder %s24, 0
      %p238 = por %p236, %p237
      %p239 = scmp.ne.s32.totalorder %s231, %s233
      %p240 = scmp.eq.s32.totalorder %s29, 1
      %p241 = por %p239, %p240
      %p242 = scmp.ne.s32.totalorder %s233, %s234
      %p243 = scmp.eq.s32.totalorder %s29, 0
      %p244 = por %p242, %p243
      %p245 = scmp.ne.s32.totalorder %s233, %s234
      %p246 = scmp.eq.s32.totalorder %s30, 1
      %p247 = por %p245, %p246
      %p249 = scmp.ne.s32.totalorder %s234, %s248
      %p250 = scmp.eq.s32.totalorder %s30, 0
      %p251 = por %p249, %p250
      %s253 = sadd.s32 %s252, 1
      %p256 = scmp.eq.s32.totalorder %s24, 1
      %p257 = scmp.ne.s32.totalorder %s252, %s254
      %p258 = scmp.eq.s32.totalorder %s24, 0
      %p259 = por %p257, %p258
      %p260 = scmp.ne.s32.totalorder %s252, %s254
      %p261 = scmp.eq.s32.totalorder %s29, 1
      %p262 = por %p260, %p261
      %p263 = scmp.ne.s32.totalorder %s254, %s255
      %p264 = scmp.eq.s32.totalorder %s29, 0
      %p265 = por %p263, %p264
      %p266 = scmp.ne.s32.totalorder %s254, %s255
      %p267 = scmp.eq.s32.totalorder %s30, 1
      %p268 = por %p266, %p267
      %p270 = scmp.ne.s32.totalorder %s255, %s269
      %p271 = scmp.eq.s32.totalorder %s30, 0
      %p272 = por %p270, %p271
      %s274 = sadd.s32 %s273, 1
      %p277 = scmp.eq.s32.totalorder %s24, 1
      %p278 = scmp.ne.s32.totalorder %s273, %s275
      %p279 = scmp.eq.s32.totalorder %s24, 0
      %p280 = por %p278, %p279
      %p281 = scmp.ne.s32.totalorder %s273, %s275
      %p282 = scmp.eq.s32.totalorder %s29, 1
      %p283 = por %p281, %p282
      %p284 = scmp.ne.s32.totalorder %s275, %s276
      %p285 = scmp.eq.s32.totalorder %s29, 0
      %p286 = por %p284, %p285
      %p287 = scmp.ne.s32.totalorder %s275, %s276
      %p288 = scmp.eq.s32.totalorder %s30, 1
      %p289 = por %p287, %p288
      %p291 = scmp.ne.s32.totalorder %s276, %s290
      %p292 = scmp.eq.s32.totalorder %s30, 0
      %p293 = por %p291, %p292
      %s295 = sadd.s32 %s294, 1
      %p298 = scmp.eq.s32.totalorder %s24, 1
      %p299 = scmp.ne.s32.totalorder %s294, %s296
      %p300 = scmp.eq.s32.totalorder %s24, 0
      %p301 = por %p299, %p300
      %p302 = scmp.ne.s32.totalorder %s294, %s296
      %p303 = scmp.eq.s32.totalorder %s29, 1
      %p304 = por %p302, %p303
      %p305 = scmp.ne.s32.totalorder %s296, %s297
      %p306 = scmp.eq.s32.totalorder %s29, 0
      %p307 = por %p305, %p306
      %p308 = scmp.ne.s32.totalorder %s296, %s297
      %p309 = scmp.eq.s32.totalorder %s30, 1
      %p310 = por %p308, %p309
      %p312 = scmp.ne.s32.totalorder %s297, %s311
      %p313 = scmp.eq.s32.totalorder %s30, 0
      %p314 = por %p312, %p313
      %s316 = sadd.s32 %s315, 1
      %p319 = scmp.eq.s32.totalorder %s24, 1
      %p320 = scmp.ne.s32.totalorder %s315, %s317
      %p321 = scmp.eq.s32.totalorder %s24, 0
      %p322 = por %p320, %p321
      %p323 = scmp.ne.s32.totalorder %s315, %s317
      %p324 = scmp.eq.s32.totalorder %s29, 1
      %p325 = por %p323, %p324
      %p326 = scmp.ne.s32.totalorder %s317, %s318
      %p327 = scmp.eq.s32.totalorder %s29, 0
      %p328 = por %p326, %p327
      %p329 = scmp.ne.s32.totalorder %s317, %s318
      %p330 = scmp.eq.s32.totalorder %s30, 1
      %p331 = por %p329, %p330
      %p333 = scmp.ne.s32.totalorder %s318, %s332
      %p334 = scmp.eq.s32.totalorder %s30, 0
      %p335 = por %p333, %p334
      %s337 = sadd.s32 %s336, 1
      %p340 = scmp.eq.s32.totalorder %s24, 1
      %p341 = scmp.ne.s32.totalorder %s336, %s338
      %p342 = scmp.eq.s32.totalorder %s24, 0
      %p343 = por %p341, %p342
      %p344 = scmp.ne.s32.totalorder %s336, %s338
      %p345 = scmp.eq.s32.totalorder %s29, 1
      %p346 = por %p344, %p345
      %p347 = scmp.ne.s32.totalorder %s338, %s339
      %p348 = scmp.eq.s32.totalorder %s29, 0
      %p349 = por %p347, %p348
      %p350 = scmp.ne.s32.totalorder %s338, %s339
      %p351 = scmp.eq.s32.totalorder %s30, 1
      %p352 = por %p350, %p351
      %p354 = scmp.ne.s32.totalorder %s339, %s353
      %p355 = scmp.eq.s32.totalorder %s30, 0
      %p356 = por %p354, %p355
      %s357 = ssub.s32 %s24, %s31
      %p358 = scmp.eq.s32.totalorder %s357, 0
      %s360 = sadd.s32 %s359, 1
      %s361 = scalar_select %p358, %s359, %s360
      %p364 = pneg %p358
      %p365 = scmp.eq.s32.totalorder %s24, 1
      %p366 = por %p364, %p365
      %p367 = scmp.ne.s32.totalorder %s359, %s362
      %p368 = scmp.eq.s32.totalorder %s24, 0
      %p369 = por %p367, %p368
      %p370 = scmp.ne.s32.totalorder %s359, %s362
      %p371 = scmp.eq.s32.totalorder %s29, 1
      %p372 = por %p370, %p371
      %p373 = scmp.ne.s32.totalorder %s362, %s363
      %p374 = scmp.eq.s32.totalorder %s29, 0
      %p375 = por %p373, %p374
      %p376 = scmp.ne.s32.totalorder %s362, %s363
      %p377 = scmp.eq.s32.totalorder %s30, 1
      %p378 = por %p376, %p377
      %p380 = scmp.ne.s32.totalorder %s363, %s379
      %p381 = scmp.eq.s32.totalorder %s30, 0
      %p382 = por %p380, %p381
      %p383 = scmp.le.s32.totalorder 1, %s24
      %p384 = scmp.lt.s32.totalorder %s24, 3
      %p385 = pnand %p383, %p384
      %p386 = pneg %p385
      // Predicated region
      $region9: #{tpu_custom_call.1} parent=5 // pred_check
        _
      $region10: #{tpu_custom_call.1} parent=5 // pred_check_branch
        %388 = sbr.rel (%p385) target = $region12
      $region11: #{tpu_custom_call.1} parent=5 // pred_region
        %s389 = ssub.s32 %s24, 1
        // Predicated region
        $region13: #{tpu_custom_call.1} parent=11 // pred_check
          %p390 = pneg %p97
        $region14: #{tpu_custom_call.1} parent=11 // pred_check_branch
          %392 = sbr.rel (%p390) target = $region16
        $region15: #{tpu_custom_call.1} parent=11 // pred_region
          _
        $region16: #{tpu_custom_call.1} parent=11 // pred_fallthru
          _
        // Predicated region
        $region17: #{tpu_custom_call.1} parent=11 // pred_check
          %p393 = pneg %p118
        $region18: #{tpu_custom_call.1} parent=11 // pred_check_branch
          %395 = sbr.rel (%p393) target = $region20
        $region19: #{tpu_custom_call.1} parent=11 // pred_region
          _
        $region20: #{tpu_custom_call.1} parent=11 // pred_fallthru
          _
        // Predicated region
        $region21: #{tpu_custom_call.1} parent=11 // pred_check
          %p396 = pneg %p139
        $region22: #{tpu_custom_call.1} parent=11 // pred_check_branch
          %398 = sbr.rel (%p396) target = $region24
        $region23: #{tpu_custom_call.1} parent=11 // pred_region
          _
        $region24: #{tpu_custom_call.1} parent=11 // pred_fallthru
          _
        // Predicated region
        $region25: #{tpu_custom_call.1} parent=11 // pred_check
          %p399 = pneg %p160
        $region26: #{tpu_custom_call.1} parent=11 // pred_check_branch
          %401 = sbr.rel (%p399) target = $region28
        $region27: #{tpu_custom_call.1} parent=11 // pred_region
          _
        $region28: #{tpu_custom_call.1} parent=11 // pred_fallthru
          _
        // Predicated region
        $region29: #{tpu_custom_call.1} parent=11 // pred_check
          %p402 = pneg %p181
        $region30: #{tpu_custom_call.1} parent=11 // pred_check_branch
          %404 = sbr.rel (%p402) target = $region32
        $region31: #{tpu_custom_call.1} parent=11 // pred_region
          _
        $region32: #{tpu_custom_call.1} parent=11 // pred_fallthru
          _
        // Predicated region
        $region33: #{tpu_custom_call.1} parent=11 // pred_check
          %p405 = pneg %p202
        $region34: #{tpu_custom_call.1} parent=11 // pred_check_branch
          %407 = sbr.rel (%p405) target = $region36
        $region35: #{tpu_custom_call.1} parent=11 // pred_region
          _
        $region36: #{tpu_custom_call.1} parent=11 // pred_fallthru
          _
        // Predicated region
        $region37: #{tpu_custom_call.1} parent=11 // pred_check
          %p408 = pneg %p223
        $region38: #{tpu_custom_call.1} parent=11 // pred_check_branch
          %410 = sbr.rel (%p408) target = $region40
        $region39: #{tpu_custom_call.1} parent=11 // pred_region
          _
        $region40: #{tpu_custom_call.1} parent=11 // pred_fallthru
          _
        // Predicated region
        $region41: #{tpu_custom_call.1} parent=11 // pred_check
          %p411 = pneg %p244
        $region42: #{tpu_custom_call.1} parent=11 // pred_check_branch
          %413 = sbr.rel (%p411) target = $region44
        $region43: #{tpu_custom_call.1} parent=11 // pred_region
          _
        $region44: #{tpu_custom_call.1} parent=11 // pred_fallthru
          _
        // Predicated region
        $region45: #{tpu_custom_call.1} parent=11 // pred_check
          %p414 = pneg %p265
        $region46: #{tpu_custom_call.1} parent=11 // pred_check_branch
          %416 = sbr.rel (%p414) target = $region48
        $region47: #{tpu_custom_call.1} parent=11 // pred_region
          _
        $region48: #{tpu_custom_call.1} parent=11 // pred_fallthru
          _
        // Predicated region
        $region49: #{tpu_custom_call.1} parent=11 // pred_check
          %p417 = pneg %p286
        $region50: #{tpu_custom_call.1} parent=11 // pred_check_branch
          %419 = sbr.rel (%p417) target = $region52
        $region51: #{tpu_custom_call.1} parent=11 // pred_region
          _
        $region52: #{tpu_custom_call.1} parent=11 // pred_fallthru
          _
        // Predicated region
        $region53: #{tpu_custom_call.1} parent=11 // pred_check
          %p420 = pneg %p307
        $region54: #{tpu_custom_call.1} parent=11 // pred_check_branch
          %422 = sbr.rel (%p420) target = $region56
        $region55: #{tpu_custom_call.1} parent=11 // pred_region
          _
        $region56: #{tpu_custom_call.1} parent=11 // pred_fallthru
          _
        // Predicated region
        $region57: #{tpu_custom_call.1} parent=11 // pred_check
          %p423 = pneg %p328
        $region58: #{tpu_custom_call.1} parent=11 // pred_check_branch
          %425 = sbr.rel (%p423) target = $region60
        $region59: #{tpu_custom_call.1} parent=11 // pred_region
          _
        $region60: #{tpu_custom_call.1} parent=11 // pred_fallthru
          _
        // Predicated region
        $region61: #{tpu_custom_call.1} parent=11 // pred_check
          %p426 = pneg %p349
        $region62: #{tpu_custom_call.1} parent=11 // pred_check_branch
          %428 = sbr.rel (%p426) target = $region64
        $region63: #{tpu_custom_call.1} parent=11 // pred_region
          _
        $region64: #{tpu_custom_call.1} parent=11 // pred_fallthru
          _
      $region12: #{tpu_custom_call.1} parent=5 // pred_fallthru
        _
      %p429 = scmp.lt.s32.totalorder %s24, 2
      // Predicated region
      $region65: #{tpu_custom_call.1} parent=5 // pred_check
        %p430 = pneg %p429
      $region66: #{tpu_custom_call.1} parent=5 // pred_check_branch
        %432 = sbr.rel (%p430) target = $region68
      $region67: #{tpu_custom_call.1} parent=5 // pred_region
        // Predicated region
        $region69: #{tpu_custom_call.1} parent=67 // pred_check
          %p433 = pneg %p44
        $region70: #{tpu_custom_call.1} parent=67 // pred_check_branch
          %435 = sbr.rel (%p433) target = $region72
        $region71: #{tpu_custom_call.1} parent=67 // pred_region
          %p436 = scmp.lt.s32.totalorder %s24, 1
          %s437 = scalar_select %p436, %s24, 1
          %s438 = smul.addr %s437, 6
          %s439 = smul.addr %s438, 4
          %s440 = scalar_lea.vmem %s0, %s439
        $region72: #{tpu_custom_call.1} parent=67 // pred_fallthru
          _
        // Predicated region
        $region73: #{tpu_custom_call.1} parent=67 // pred_check
          %p441 = pneg %p70
        $region74: #{tpu_custom_call.1} parent=67 // pred_check_branch
          %443 = sbr.rel (%p441) target = $region76
        $region75: #{tpu_custom_call.1} parent=67 // pred_region
          %p444 = scmp.lt.s32.totalorder %s24, 1
          %s445 = scalar_select %p444, %s24, 1
          %s446 = smul.addr %s445, 6
          %s447 = smul.addr %s446, 4
          %s448 = scalar_lea.vmem %s1, %s447
        $region76: #{tpu_custom_call.1} parent=67 // pred_fallthru
          _
      $region68: #{tpu_custom_call.1} parent=5 // pred_fallthru
        _
      %p449 = scmp.le.s32.totalorder 1, %s24
      %p450 = scmp.lt.s32.totalorder %s24, 3
      %p451 = pnand %p449, %p450
      %p452 = pneg %p451
      // Predicated region
      $region77: #{tpu_custom_call.1} parent=5 // pred_check
        _
      $region78: #{tpu_custom_call.1} parent=5 // pred_check_branch
        %454 = sbr.rel (%p451) target = $region80
      $region79: #{tpu_custom_call.1} parent=5 // pred_region
        %s455 = ssub.s32 %s24, 1
        %p456 = scmp.lt.s32.totalorder %s29, 1
        %s457 = scalar_select %p456, %s29, 1
        %s458 = smul.addr %s457, 6
        %s459 = smul.addr %s458, 4
        %s460 = scalar_lea.vmem %s0, %s459
        %p461 = pneg %p50
        %p462 = pneg %p47
        %p463 = scmp.lt.s32.totalorder %s29, 1
        %s464 = scalar_select %p463, %s29, 1
        %s465 = smul.addr %s464, 6
        %s466 = smul.addr %s465, 4
        %s467 = scalar_lea.vmem %s1, %s466
        %p468 = pneg %p76
        %p469 = pneg %p73
        %p470 = pneg %p97
        %p471 = pneg %p94
        %p472 = pneg %p118
        %p473 = pneg %p115
        %p474 = pneg %p139
        %p475 = pneg %p136
        %p476 = pneg %p160
        %p477 = pneg %p157
        %p478 = pneg %p181
        %p479 = pneg %p178
        %p480 = pneg %p202
        %p481 = pneg %p199
        %p482 = pneg %p223
        %p483 = pneg %p220
        %p484 = pneg %p244
        %p485 = pneg %p241
        %p486 = pneg %p265
        %p487 = pneg %p262
        %p488 = pneg %p286
        %p489 = pneg %p283
        %p490 = pneg %p307
        %p491 = pneg %p304
        %p492 = pneg %p328
        %p493 = pneg %p325
        %p494 = pneg %p349
        %p495 = pneg %p346
        %p496 = pneg %p375
        %p497 = pneg %p372
        %s498 = sand.u32 %s362, 1
        %s499 = scalar_lea.sflag [#allocation3], %s498
        %s500 = sand.u32 %s362, 1
        %s501 = scalar_lea.vmem [#allocation2], %s500
        %p502 = scmp.lt.s32.totalorder %s29, 1
        %s503 = scalar_select %p502, %s29, 1
        %s504 = smul.addr %s503, 6
        %s505 = smul.addr %s504, 4
        %s506 = scalar_lea.vmem %s0, %s505
        %p507 = scmp.lt.s32.totalorder %s29, 1
        %s508 = scalar_select %p507, %s29, 1
        %s509 = smul.addr %s508, 6
        %s510 = smul.addr %s509, 4
        %s511 = scalar_lea.vmem %s1, %s510
        %v513 = vld [vmem:[%s9] sm:$0xf]
        %v514 = vld [vmem:[%s9 + $0x4] sm:$0xf]
        %v515 = vld [vmem:[%s9 + $0x8] sm:$0xf]
        %v516 = vld [vmem:[%s9 + $0xc] sm:$0xf]
        %v517 = vld [vmem:[%s10] sm:$0xf]
        %v518 = vld [vmem:[%s10 + $0x4] sm:$0xf]
        %v519 = vld [vmem:[%s10 + $0x8] sm:$0xf]
        %v520 = vld [vmem:[%s10 + $0xc] sm:$0xf]
        %v521 = vld [vmem:[%s11] sm:$0x3]
        %v522 = vld [vmem:[%s12] sm:$0x3]
        %v523 = vld [vmem:[%s13] sm:$0x3f]
        %v524 = vld [vmem:[%s506] sm:$0xf]
        %v525 = vld [vmem:[%s506 + $0x4] sm:$0xf]
        %v526 = vld [vmem:[%s506 + $0x8] sm:$0xf]
        %v527 = vld [vmem:[%s506 + $0xc] sm:$0xf]
        %v528 = vld [vmem:[%s506 + $0x10] sm:$0xf]
        %v529 = vld [vmem:[%s506 + $0x14] sm:$0xf]
        %v530 = vunpack.c.l.bf16 %v524
        %v531 = vunpack.c.l.bf16 %v525
        %v532 = vunpack.c.l.bf16 %v526
        %v533 = vunpack.c.l.bf16 %v527
        %v534 = vunpack.c.l.bf16 %v528
        %v535 = vunpack.c.l.bf16 %v529
        %v536 = vld [vmem:[%s511] sm:$0xf]
        %v537 = vld [vmem:[%s511 + $0x4] sm:$0xf]
        %v538 = vld [vmem:[%s511 + $0x8] sm:$0xf]
        %v539 = vld [vmem:[%s511 + $0xc] sm:$0xf]
        %v540 = vld [vmem:[%s511 + $0x10] sm:$0xf]
        %v541 = vld [vmem:[%s511 + $0x14] sm:$0xf]
        %v542 = vunpack.c.l.bf16 %v536
        %v543 = vunpack.c.l.bf16 %v537
        %v544 = vunpack.c.l.bf16 %v538
        %v545 = vunpack.c.l.bf16 %v539
        %v546 = vunpack.c.l.bf16 %v540
        %v547 = vunpack.c.l.bf16 %v541
        %v548 = vld [vmem:[%s2] sm:$0xf]
        %v549 = vld [vmem:[%s2 + $0x4] sm:$0xf]
        %v550 = vld [vmem:[%s2 + $0x8] sm:$0xf]
        %v551 = vld [vmem:[%s2 + $0xc] sm:$0xf]
        %v552 = vld [vmem:[%s4] sm:$0xf]
        %v553 = vld [vmem:[%s4 + $0x4] sm:$0xf]
        %v554 = vld [vmem:[%s4 + $0x8] sm:$0xf]
        %v555 = vld [vmem:[%s4 + $0xc] sm:$0xf]
        %v556 = vlaneseq
        %v557 = vshrl.u32 %v556, 7
        %v558 = vsub.s32 0, %v557
        %v559 = vrot.slane %v522, %v558
        %v566 = vunpack.c.l.b16 %v524
        %v567 = vunpack.c.l.b16 %v525
        %v568 = vunpack.c.l.b16 %v526
        %v569 = vunpack.c.l.b16 %v527
        %v570 = vunpack.c.l.b16 %v528
        %v571 = vunpack.c.l.b16 %v529
        %v572 = vpack.c.b16 %v567, %v566
        %v573 = vpack.c.b16 %v569, %v568
        %v574 = vpack.c.b16 %v571, %v570
        %v579 = vunpack.c.l.b16 %v548
        %v580 = vunpack.c.l.b16 %v549
        %v581 = vunpack.c.l.b16 %v550
        %v582 = vunpack.c.l.b16 %v551
        %v583 = vpack.c.b16 %v580, %v579
        %v584 = vpack.c.b16 %v582, %v581
        %vm587 = vcmask 261120
        %v589 = vsel %vm587, %v572, 0
        %v592 = vsel %vm587, %v573, 0
        %v595 = vsel %vm587, %v574, 0
        %597 = vmatprep.subr.bf16.mxu0 0
        %598 = vmatpush1.bf16.msra.mxu0 %v583
        %599 = vmatprep.subr.bf16.mxu0 0
        %600 = vmatpush1.bf16.msra.mxu0 %v584
        %601 = vmatprep.subr.bf16.mxu0 0
        %602 = vmatpush1.bf16.msra.mxu0 0
        %603 = vmatprep.subr.bf16.mxu0 0
        %604 = vmatpush1.bf16.msra.mxu0 0
        %605 = vmatprep.subr.bf16.mxu0 0
        %606 = vmatpush1.bf16.msra.mxu0 0
        %607 = vmatprep.subr.bf16.mxu0 0
        %608 = vmatpush1.bf16.msra.mxu0 0
        %609 = vmatprep.subr.bf16.mxu0 0
        %610 = vmatpush1.bf16.msra.mxu0 0
        %611 = vmatprep.subr.bf16.mxu0 0
        %612 = vmatpush1.bf16.msra.mxu0 0
        %613 = vmatprep.subr.bf16.mxu0 0
        %614 = vmatpush1.bf16.msra.mxu0 0
        %615 = vmatprep.subr.bf16.mxu0 0
        %616 = vmatpush1.bf16.msra.mxu0 0
        %617 = vmatprep.subr.bf16.mxu0 0
        %618 = vmatpush1.bf16.msra.mxu0 0
        %619 = vmatprep.subr.bf16.mxu0 0
        %620 = vmatpush1.bf16.msra.mxu0 0
        %621 = vmatprep.subr.bf16.mxu0 0
        %622 = vmatpush1.bf16.msra.mxu0 0
        %623 = vmatprep.subr.bf16.mxu0 0
        %624 = vmatpush1.bf16.msra.mxu0 0
        %625 = vmatprep.subr.bf16.mxu0 0
        %626 = vmatpush1.bf16.msra.mxu0 0
        %627 = vmatprep.subr.bf16.mxu0 0
        %628 = vmatpush1.bf16.msra.mxu0 0
        %629 = vmatprep.mubr.bf16.mxu0 0
        %630 = vmatmul.mubr.bf16.gmra.mrb[0].mxu0 %v589
        %v631 = vpop.f32.mrb[0].mxu0
        %v632 = vadd.f32 %v559, %v631
        %v633 = vpop.f32.mrb[0].mxu0
        %v634 = vpop.f32.mrb[0].mxu0
        %v635 = vadd.f32 %v559, %v634
        %v636 = vpop.f32.mrb[0].mxu0
        %637 = vmatprep.mubr.bf16.mxu0 0
        %638 = vmatmul.mubr.bf16.gmra.mrb[0].mxu0 %v592
        %v639 = vpop.f32.mrb[0].mxu0
        %v640 = vadd.f32 %v559, %v639
        %v641 = vpop.f32.mrb[0].mxu0
        %v642 = vpop.f32.mrb[0].mxu0
        %v643 = vadd.f32 %v559, %v642
        %v644 = vpop.f32.mrb[0].mxu0
        %645 = vmatprep.mubr.bf16.mxu0 0
        %646 = vmatmul.mubr.bf16.gmra.mrb[0].mxu0 %v595
        %v647 = vpop.f32.mrb[0].mxu0
        %v648 = vadd.f32 %v559, %v647
        %v649 = vpop.f32.mrb[0].mxu0
        %v650 = vpop.f32.mrb[0].mxu0
        %v651 = vadd.f32 %v559, %v650
        %v652 = vpop.f32.mrb[0].mxu0
        %653 = vdwg.mxu0
        %vm654 = vcmask 523520
        %v655 = vsel %vm654, %v632, -inf
        %v656 = vsel %vm654, %v635, -inf
        %v657 = vsel %vm654, %v640, -inf
        %v658 = vsel %vm654, %v643, -inf
        %v659 = vsel %vm654, %v648, -inf
        %v660 = vmax.f32 %v655, %v659
        %v661 = vsel %vm654, %v651, -inf
        %v662 = vmax.f32 %v656, %v661
        %v663 = vmax.f32 %v660, %v662
        %v664 = vmax.f32 %v657, %v658
        %v665 = vmax.f32 %v663, %v664
        %v666 = vrot.slane %v665, 4
        %v667 = vmax.f32 %v665, %v666
        %v668 = vrot.slane %v667, 2
        %v669 = vmax.f32 %v667, %v668
        %v670 = vrot.slane %v669, 1
        %v671 = vmax.f32 %v669, %v670
        %v672 = vsub.f32 %v632, %v671
        %v673 = vsub.f32 %v635, %v671
        %v674 = vsub.f32 %v640, %v671
        %v675 = vsub.f32 %v643, %v671
        %v676 = vsub.f32 %v648, %v671
        %v677 = vsub.f32 %v651, %v671
        %v678 = vmul.f32 %v672, 1.442695
        %v679 = vpow.pop %v678
        %v680 = vmul.f32 %v673, 1.442695
        %v681 = vpow.pop %v680
        %v682 = vmul.f32 %v674, 1.442695
        %v683 = vpow.pop %v682
        %v684 = vmul.f32 %v675, 1.442695
        %v685 = vpow.pop %v684
        %v686 = vmul.f32 %v676, 1.442695
        %v687 = vpow.pop %v686
        %v688 = vmul.f32 %v677, 1.442695
        %v689 = vpow.pop %v688
        %v690 = vsel %vm654, %v679, 0.0
        %v691 = vsel %vm654, %v681, 0.0
        %v692 = vadd.f32 %v690, %v691
        %v693 = vsel %vm654, %v683, 0.0
        %v694 = vadd.f32 %v692, %v693
        %v695 = vsel %vm654, %v685, 0.0
        %v696 = vadd.f32 %v694, %v695
        %v697 = vsel %vm654, %v687, 0.0
        %v698 = vadd.f32 %v696, %v697
        %v699 = vsel %vm654, %v689, 0.0
        %v700 = vadd.f32 %v698, %v699
        %v701 = vrot.slane %v700, 4
        %v702 = vadd.f32 %v700, %v701
        %v703 = vrot.slane %v702, 2
        %v704 = vadd.f32 %v702, %v703
        %v705 = vrot.slane %v704, 1
        %v706 = vadd.f32 %v704, %v705
        %v707 = vrcp.pop %v706
        %v708 = vmul.f32 %v679, %v707
        %v709 = vmul.f32 %v681, %v707
        %v710 = vmul.f32 %v683, %v707
        %v711 = vmul.f32 %v685, %v707
        %v712 = vmul.f32 %v687, %v707
        %v713 = vmul.f32 %v689, %v707
        %v714 = vsel %vm587, %v632, -inf
        %715 = vmax.xlane.f32.xlu0 %v714
        %v716 = vpop.xlane.xlu0 %715
        %v717 = vsel %vm587, %v635, -inf
        %718 = vmax.xlane.f32.xlu0 %v717
        %v719 = vpop.xlane.xlu0 %718
        %v720 = vsel %vm587, %v640, -inf
        %721 = vmax.xlane.f32.xlu0 %v720
        %v722 = vpop.xlane.xlu0 %721
        %v723 = vsel %vm587, %v643, -inf
        %724 = vmax.xlane.f32.xlu0 %v723
        %v725 = vpop.xlane.xlu0 %724
        %v726 = vsel %vm587, %v648, -inf
        %727 = vmax.xlane.f32.xlu0 %v726
        %v728 = vpop.xlane.xlu0 %727
        %v729 = vsel %vm587, %v651, -inf
        %730 = vmax.xlane.f32.xlu0 %v729
        %v731 = vpop.xlane.xlu0 %730
        %v732 = vsub.f32 %v632, %v716
        %v733 = vsub.f32 %v635, %v719
        %v734 = vsub.f32 %v640, %v722
        %v735 = vsub.f32 %v643, %v725
        %v736 = vsub.f32 %v648, %v728
        %v737 = vsub.f32 %v651, %v731
        %v738 = vmul.f32 %v732, 1.442695
        %v739 = vpow.pop %v738
        %v740 = vmul.f32 %v733, 1.442695
        %v741 = vpow.pop %v740
        %v742 = vmul.f32 %v734, 1.442695
        %v743 = vpow.pop %v742
        %v744 = vmul.f32 %v735, 1.442695
        %v745 = vpow.pop %v744
        %v746 = vmul.f32 %v736, 1.442695
        %v747 = vpow.pop %v746
        %v748 = vmul.f32 %v737, 1.442695
        %v749 = vpow.pop %v748
        %v750 = vpack.c.bf16 %v741, %v739
        %v751 = vpack.c.bf16 %v745, %v743
        %v752 = vpack.c.bf16 %v749, %v747
        %v757 = vunpack.c.l.b16 %v517
        %v758 = vunpack.c.l.b16 %v518
        %v759 = vunpack.c.l.b16 %v519
        %v760 = vunpack.c.l.b16 %v520
        %v761 = vpack.c.b16 %v758, %v757
        %v762 = vpack.c.b16 %v760, %v759
        %v766 = vsel %vm587, %v750, 0
        %v769 = vsel %vm587, %v751, 0
        %v772 = vsel %vm587, %v752, 0
        %774 = vmatprep.subr.bf16.mxu0 0
        %775 = vmatpush1.bf16.msra.mxu0 %v761
        %776 = vmatprep.subr.bf16.mxu0 0
        %777 = vmatpush1.bf16.msra.mxu0 %v762
        %778 = vmatprep.subr.bf16.mxu0 0
        %779 = vmatpush1.bf16.msra.mxu0 0
        %780 = vmatprep.subr.bf16.mxu0 0
        %781 = vmatpush1.bf16.msra.mxu0 0
        %782 = vmatprep.subr.bf16.mxu0 0
        %783 = vmatpush1.bf16.msra.mxu0 0
        %784 = vmatprep.subr.bf16.mxu0 0
        %785 = vmatpush1.bf16.msra.mxu0 0
        %786 = vmatprep.subr.bf16.mxu0 0
        %787 = vmatpush1.bf16.msra.mxu0 0
        %788 = vmatprep.subr.bf16.mxu0 0
        %789 = vmatpush1.bf16.msra.mxu0 0
        %790 = vmatprep.subr.bf16.mxu0 0
        %791 = vmatpush1.bf16.msra.mxu0 0
        %792 = vmatprep.subr.bf16.mxu0 0
        %793 = vmatpush1.bf16.msra.mxu0 0
        %794 = vmatprep.subr.bf16.mxu0 0
        %795 = vmatpush1.bf16.msra.mxu0 0
        %796 = vmatprep.subr.bf16.mxu0 0
        %797 = vmatpush1.bf16.msra.mxu0 0
        %798 = vmatprep.subr.bf16.mxu0 0
        %799 = vmatpush1.bf16.msra.mxu0 0
        %800 = vmatprep.subr.bf16.mxu0 0
        %801 = vmatpush1.bf16.msra.mxu0 0
        %802 = vmatprep.subr.bf16.mxu0 0
        %803 = vmatpush1.bf16.msra.mxu0 0
        %804 = vmatprep.subr.bf16.mxu0 0
        %805 = vmatpush1.bf16.msra.mxu0 0
        %806 = vmatprep.mubr.bf16.mxu0 0
        %807 = vmatmul.mubr.bf16.gmra.mrb[0].mxu0 %v766
        %v808 = vpop.f32.mrb[0].mxu0
        %v809 = vadd.f32 0.0, %v808
        %v810 = vpop.f32.mrb[0].mxu0
        %v811 = vpop.f32.mrb[0].mxu0
        %v812 = vadd.f32 0.0, %v811
        %v813 = vpop.f32.mrb[0].mxu0
        %814 = vmatprep.mubr.bf16.mxu0 0
        %815 = vmatmul.mubr.bf16.gmra.mrb[0].mxu0 %v769
        %v816 = vpop.f32.mrb[0].mxu0
        %v817 = vadd.f32 0.0, %v816
        %v818 = vpop.f32.mrb[0].mxu0
        %v819 = vpop.f32.mrb[0].mxu0
        %v820 = vadd.f32 0.0, %v819
        %v821 = vpop.f32.mrb[0].mxu0
        %822 = vmatprep.mubr.bf16.mxu0 0
        %823 = vmatmul.mubr.bf16.gmra.mrb[0].mxu0 %v772
        %v824 = vpop.f32.mrb[0].mxu0
        %v825 = vadd.f32 0.0, %v824
        %v826 = vpop.f32.mrb[0].mxu0
        %v827 = vpop.f32.mrb[0].mxu0
        %v828 = vadd.f32 0.0, %v827
        %v829 = vpop.f32.mrb[0].mxu0
        %830 = vdwg.mxu0
        %v831 = vpack.c.bf16 %v812, %v809
        %v832 = vpack.c.bf16 %v820, %v817
        %v833 = vpack.c.bf16 %v828, %v825
        %vm834 = vcmask 31744
        %v836 = vsel %vm834, %v831, 0
        %v839 = vsel %vm834, %v832, 0
        %v842 = vsel %vm834, %v833, 0
        %vm844 = vcmask 1041408
        %v846 = vsel %vm844, %v521, 0
        %848 = vmatprep.subr.bf16.mxu0 0
        %849 = vmatpush1.bf16.msra.mxu0 %v846
        %850 = vmatprep.subr.bf16.mxu0 0
        %851 = vmatpush1.bf16.msra.mxu0 0
        %852 = vmatprep.subr.bf16.mxu0 0
        %853 = vmatpush1.bf16.msra.mxu0 0
        %854 = vmatprep.subr.bf16.mxu0 0
        %855 = vmatpush1.bf16.msra.mxu0 0
        %856 = vmatprep.subr.bf16.mxu0 0
        %857 = vmatpush1.bf16.msra.mxu0 0
        %858 = vmatprep.subr.bf16.mxu0 0
        %859 = vmatpush1.bf16.msra.mxu0 0
        %860 = vmatprep.subr.bf16.mxu0 0
        %861 = vmatpush1.bf16.msra.mxu0 0
        %862 = vmatprep.subr.bf16.mxu0 0
        %863 = vmatpush1.bf16.msra.mxu0 0
        %864 = vmatprep.subr.bf16.mxu0 0
        %865 = vmatpush1.bf16.msra.mxu0 0
        %866 = vmatprep.subr.bf16.mxu0 0
        %867 = vmatpush1.bf16.msra.mxu0 0
        %868 = vmatprep.subr.bf16.mxu0 0
        %869 = vmatpush1.bf16.msra.mxu0 0
        %870 = vmatprep.subr.bf16.mxu0 0
        %871 = vmatpush1.bf16.msra.mxu0 0
        %872 = vmatprep.subr.bf16.mxu0 0
        %873 = vmatpush1.bf16.msra.mxu0 0
        %874 = vmatprep.subr.bf16.mxu0 0
        %875 = vmatpush1.bf16.msra.mxu0 0
        %876 = vmatprep.subr.bf16.mxu0 0
        %877 = vmatpush1.bf16.msra.mxu0 0
        %878 = vmatprep.subr.bf16.mxu0 0
        %879 = vmatpush1.bf16.msra.mxu0 0
        %880 = vmatprep.mubr.bf16.mxu0 0
        %881 = vmatmul.mubr.bf16.gmra.mrb[0].mxu0 %v836
        %v882 = vpop.f32.mrb[0].mxu0
        %v883 = vadd.f32 0.0, %v882
        %v884 = vpop.f32.mrb[0].mxu0
        %v885 = vpop.f32.mrb[0].mxu0
        %v886 = vadd.f32 0.0, %v885
        %v887 = vpop.f32.mrb[0].mxu0
        %888 = vmatprep.mubr.bf16.mxu0 0
        %889 = vmatmul.mubr.bf16.gmra.mrb[0].mxu0 %v839
        %v890 = vpop.f32.mrb[0].mxu0
        %v891 = vadd.f32 0.0, %v890
        %v892 = vpop.f32.mrb[0].mxu0
        %v893 = vpop.f32.mrb[0].mxu0
        %v894 = vadd.f32 0.0, %v893
        %v895 = vpop.f32.mrb[0].mxu0
        %896 = vmatprep.mubr.bf16.mxu0 0
        %897 = vmatmul.mubr.bf16.gmra.mrb[0].mxu0 %v842
        %v898 = vpop.f32.mrb[0].mxu0
        %v899 = vadd.f32 0.0, %v898
        %v900 = vpop.f32.mrb[0].mxu0
        %v901 = vpop.f32.mrb[0].mxu0
        %v902 = vadd.f32 0.0, %v901
        %v903 = vpop.f32.mrb[0].mxu0
        %904 = vdwg.mxu0
        %v905 = vmax.f32 %v883, 1e-20
        %v906 = vmax.f32 %v886, 1e-20
        %v907 = vmax.f32 %v891, 1e-20
        %v908 = vmax.f32 %v894, 1e-20
        %v909 = vmax.f32 %v899, 1e-20
        %v910 = vmax.f32 %v902, 1e-20
        %v911 = vrcp.pop %v905
        %v912 = vrcp.pop %v906
        %v913 = vrcp.pop %v907
        %v914 = vrcp.pop %v908
        %v915 = vrcp.pop %v909
        %v916 = vrcp.pop %v910
        %v917 = vmul.f32 %v739, %v911
        %v918 = vmul.f32 %v741, %v912
        %v919 = vmul.f32 %v743, %v913
        %v920 = vmul.f32 %v745, %v914
        %v921 = vmul.f32 %v747, %v915
        %v922 = vmul.f32 %v749, %v916
        %v923 = vpack.c.bf16 %v709, %v708
        %v924 = vpack.c.bf16 %v711, %v710
        %v925 = vpack.c.bf16 %v713, %v712
        %v926 = vpack.c.bf16 %v635, %v632
        %v927 = vpack.c.bf16 %v643, %v640
        %v928 = vpack.c.bf16 %v651, %v648
        %932 = vrot.lane.b32.xlu0 %v923, 96
        %v933 = vpop.permute.xlu0 %932
        %934 = vrot.lane.b32.xlu0 %v924, 96
        %v935 = vpop.permute.xlu0 %934
        %936 = vrot.lane.b32.xlu0 %v925, 96
        %v937 = vpop.permute.xlu0 %936
        %941 = vxpose.xlu0.c.b16.start [1/8] %v933, 128
        %942 = vxpose.xlu0.c.b16.cont [2/8] %v935, 128
        %943 = vxpose.xlu0.c.b16.cont [3/8] %v937, 128
        %944 = vxpose.xlu0.c.b16.cont [4/8] 0, 128
        %945 = vxpose.xlu0.c.b16.cont [5/8] 0, 128
        %946 = vxpose.xlu0.c.b16.cont [6/8] 0, 128
        %947 = vxpose.xlu0.c.b16.cont [7/8] 0, 128
        %948 = vxpose.xlu0.c.b16.end [8/8] 0, 128
        %v949 = vpop.trf.xlu0
        %v950 = vpop.trf.xlu0
        %v951 = vpop.trf.xlu0
        %v952 = vpop.trf.xlu0
        %v953 = vpop.trf.xlu0
        %v954 = vpop.trf.xlu0
        %v955 = vpop.trf.xlu0
        %v956 = vpop.trf.xlu0
        %960 = vrot.lane.b32.xlu0 %v926, 64
        %v961 = vpop.permute.xlu0 %960
        %962 = vrot.lane.b32.xlu0 %v927, 64
        %v963 = vpop.permute.xlu0 %962
        %964 = vrot.lane.b32.xlu0 %v928, 64
        %v965 = vpop.permute.xlu0 %964
        %vm969 = vcmask 392192
        %v971 = vsel %vm969, %v949, 0
        %v974 = vsel %vm969, %v950, 0
        %976 = vmatprep.subr.bf16.mxu0 0
        %977 = vmatpush1.bf16.msra.mxu0 %v961
        %978 = vmatprep.subr.bf16.mxu0 0
        %979 = vmatpush1.bf16.msra.mxu0 %v963
        %980 = vmatprep.subr.bf16.mxu0 0
        %981 = vmatpush1.bf16.msra.mxu0 %v965
        %982 = vmatprep.subr.bf16.mxu0 0
        %983 = vmatpush1.bf16.msra.mxu0 0
        %984 = vmatprep.subr.bf16.mxu0 0
        %985 = vmatpush1.bf16.msra.mxu0 0
        %986 = vmatprep.subr.bf16.mxu0 0
        %987 = vmatpush1.bf16.msra.mxu0 0
        %988 = vmatprep.subr.bf16.mxu0 0
        %989 = vmatpush1.bf16.msra.mxu0 0
        %990 = vmatprep.subr.bf16.mxu0 0
        %991 = vmatpush1.bf16.msra.mxu0 0
        %992 = vmatprep.subr.bf16.mxu0 0
        %993 = vmatpush1.bf16.msra.mxu0 0
        %994 = vmatprep.subr.bf16.mxu0 0
        %995 = vmatpush1.bf16.msra.mxu0 0
        %996 = vmatprep.subr.bf16.mxu0 0
        %997 = vmatpush1.bf16.msra.mxu0 0
        %998 = vmatprep.subr.bf16.mxu0 0
        %999 = vmatpush1.bf16.msra.mxu0 0
        %1000 = vmatprep.subr.bf16.mxu0 0
        %1001 = vmatpush1.bf16.msra.mxu0 0
        %1002 = vmatprep.subr.bf16.mxu0 0
        %1003 = vmatpush1.bf16.msra.mxu0 0
        %1004 = vmatprep.subr.bf16.mxu0 0
        %1005 = vmatpush1.bf16.msra.mxu0 0
        %1006 = vmatprep.subr.bf16.mxu0 0
        %1007 = vmatpush1.bf16.msra.mxu0 0
        %1008 = vmatprep.mubr.bf16.mxu0 0
        %1009 = vmatmul.mubr.bf16.gmra.mrb[0].mxu0 %v971
        %v1010 = vpop.f32.mrb[0].mxu0
        %v1011 = vadd.f32 0.0, %v1010
        %v1012 = vpop.f32.mrb[0].mxu0
        %v1013 = vpop.f32.mrb[0].mxu0
        %v1014 = vadd.f32 0.0, %v1013
        %v1015 = vpop.f32.mrb[0].mxu0
        %1016 = vmatprep.mubr.bf16.mxu0 0
        %1017 = vmatmul.mubr.bf16.gmra.mrb[0].mxu0 %v974
        %v1018 = vpop.f32.mrb[0].mxu0
        %v1019 = vadd.f32 0.0, %v1018
        %v1020 = vpop.f32.mrb[0].mxu0
        %v1021 = vpop.f32.mrb[0].mxu0
        %v1022 = vadd.f32 0.0, %v1021
        %v1023 = vpop.f32.mrb[0].mxu0
        %1024 = vdwg.mxu0
        %v1025 = vpack.c.bf16 %v1014, %v1011
        %v1026 = vpack.c.bf16 %v1022, %v1019
        %v1031 = vunpack.c.l.b16 %v513
        %v1032 = vunpack.c.l.b16 %v514
        %v1033 = vunpack.c.l.b16 %v515
        %v1034 = vunpack.c.l.b16 %v516
        %v1035 = vpack.c.b16 %v1032, %v1031
        %v1036 = vpack.c.b16 %v1034, %v1033
        %v1039 = vmul.bf16 %v1025, %v1035
        %v1040 = vmul.bf16 %v1026, %v1036
        %v1041 = vpack.c.bf16 %v918, %v917
        %v1042 = vpack.c.bf16 %v920, %v919
        %v1043 = vpack.c.bf16 %v922, %v921
        %v1045 = vsel %vm587, %v1041, 0
        %v1048 = vsel %vm587, %v1042, 0
        %v1051 = vsel %vm587, %v1043, 0
        %1053 = vmatprep.subr.bf16.mxu0 0
        %1054 = vmatpush1.bf16.msra.mxu0 %v1039
        %1055 = vmatprep.subr.bf16.mxu0 0
        %1056 = vmatpush1.bf16.msra.mxu0 %v1040
        %1057 = vmatprep.subr.bf16.mxu0 0
        %1058 = vmatpush1.bf16.msra.mxu0 0
        %1059 = vmatprep.subr.bf16.mxu0 0
        %1060 = vmatpush1.bf16.msra.mxu0 0
        %1061 = vmatprep.subr.bf16.mxu0 0
        %1062 = vmatpush1.bf16.msra.mxu0 0
        %1063 = vmatprep.subr.bf16.mxu0 0
        %1064 = vmatpush1.bf16.msra.mxu0 0
        %1065 = vmatprep.subr.bf16.mxu0 0
        %1066 = vmatpush1.bf16.msra.mxu0 0
        %1067 = vmatprep.subr.bf16.mxu0 0
        %1068 = vmatpush1.bf16.msra.mxu0 0
        %1069 = vmatprep.subr.bf16.mxu0 0
        %1070 = vmatpush1.bf16.msra.mxu0 0
        %1071 = vmatprep.subr.bf16.mxu0 0
        %1072 = vmatpush1.bf16.msra.mxu0 0
        %1073 = vmatprep.subr.bf16.mxu0 0
        %1074 = vmatpush1.bf16.msra.mxu0 0
        %1075 = vmatprep.subr.bf16.mxu0 0
        %1076 = vmatpush1.bf16.msra.mxu0 0
        %1077 = vmatprep.subr.bf16.mxu0 0
        %1078 = vmatpush1.bf16.msra.mxu0 0
        %1079 = vmatprep.subr.bf16.mxu0 0
        %1080 = vmatpush1.bf16.msra.mxu0 0
        %1081 = vmatprep.subr.bf16.mxu0 0
        %1082 = vmatpush1.bf16.msra.mxu0 0
        %1083 = vmatprep.subr.bf16.mxu0 0
        %1084 = vmatpush1.bf16.msra.mxu0 0
        %1085 = vmatprep.mubr.bf16.mxu0 0
        %1086 = vmatmul.mubr.bf16.gmra.mrb[0].mxu0 %v1045
        %v1087 = vpop.f32.mrb[0].mxu0
        %v1088 = vadd.f32 0.0, %v1087
        %v1089 = vpop.f32.mrb[0].mxu0
        %v1090 = vpop.f32.mrb[0].mxu0
        %v1091 = vadd.f32 0.0, %v1090
        %v1092 = vpop.f32.mrb[0].mxu0
        %1093 = vmatprep.mubr.bf16.mxu0 0
        %1094 = vmatmul.mubr.bf16.gmra.mrb[0].mxu0 %v1048
        %v1095 = vpop.f32.mrb[0].mxu0
        %v1096 = vadd.f32 0.0, %v1095
        %v1097 = vpop.f32.mrb[0].mxu0
        %v1098 = vpop.f32.mrb[0].mxu0
        %v1099 = vadd.f32 0.0, %v1098
        %v1100 = vpop.f32.mrb[0].mxu0
        %1101 = vmatprep.mubr.bf16.mxu0 0
        %1102 = vmatmul.mubr.bf16.gmra.mrb[0].mxu0 %v1051
        %v1103 = vpop.f32.mrb[0].mxu0
        %v1104 = vadd.f32 0.0, %v1103
        %v1105 = vpop.f32.mrb[0].mxu0
        %v1106 = vpop.f32.mrb[0].mxu0
        %v1107 = vadd.f32 0.0, %v1106
        %v1108 = vpop.f32.mrb[0].mxu0
        %1109 = vdwg.mxu0
        %v1110 = vpack.c.bf16 %v1091, %v1088
        %v1111 = vpack.c.bf16 %v1099, %v1096
        %v1112 = vpack.c.bf16 %v1107, %v1104
        %v1113 = vlaneseq
        %v1114 = vshrl.u32 %v1113, 7
        %v1115 = vsub.s32 0, %v1114
        %v1116 = vrot.slane %v523, %v1115
        %v1121 = vunpack.c.l.b16 %v552
        %v1122 = vunpack.c.l.b16 %v553
        %v1123 = vunpack.c.l.b16 %v554
        %v1124 = vunpack.c.l.b16 %v555
        %v1125 = vpack.c.b16 %v1122, %v1121
        %v1126 = vpack.c.b16 %v1124, %v1123
        %v1130 = vsel %vm587, %v1110, 0
        %v1133 = vsel %vm587, %v1111, 0
        %v1136 = vsel %vm587, %v1112, 0
        %1138 = vmatprep.subr.bf16.mxu0 0
        %1139 = vmatpush1.bf16.msra.mxu0 %v1125
        %1140 = vmatprep.subr.bf16.mxu0 0
        %1141 = vmatpush1.bf16.msra.mxu0 %v1126
        %1142 = vmatprep.subr.bf16.mxu0 0
        %1143 = vmatpush1.bf16.msra.mxu0 0
        %1144 = vmatprep.subr.bf16.mxu0 0
        %1145 = vmatpush1.bf16.msra.mxu0 0
        %1146 = vmatprep.subr.bf16.mxu0 0
        %1147 = vmatpush1.bf16.msra.mxu0 0
        %1148 = vmatprep.subr.bf16.mxu0 0
        %1149 = vmatpush1.bf16.msra.mxu0 0
        %1150 = vmatprep.subr.bf16.mxu0 0
        %1151 = vmatpush1.bf16.msra.mxu0 0
        %1152 = vmatprep.subr.bf16.mxu0 0
        %1153 = vmatpush1.bf16.msra.mxu0 0
        %1154 = vmatprep.subr.bf16.mxu0 0
        %1155 = vmatpush1.bf16.msra.mxu0 0
        %1156 = vmatprep.subr.bf16.mxu0 0
        %1157 = vmatpush1.bf16.msra.mxu0 0
        %1158 = vmatprep.subr.bf16.mxu0 0
        %1159 = vmatpush1.bf16.msra.mxu0 0
        %1160 = vmatprep.subr.bf16.mxu0 0
        %1161 = vmatpush1.bf16.msra.mxu0 0
        %1162 = vmatprep.subr.bf16.mxu0 0
        %1163 = vmatpush1.bf16.msra.mxu0 0
        %1164 = vmatprep.subr.bf16.mxu0 0
        %1165 = vmatpush1.bf16.msra.mxu0 0
        %1166 = vmatprep.subr.bf16.mxu0 0
        %1167 = vmatpush1.bf16.msra.mxu0 0
        %1168 = vmatprep.subr.bf16.mxu0 0
        %1169 = vmatpush1.bf16.msra.mxu0 0
        %1170 = vmatprep.mubr.bf16.mxu0 0
        %1171 = vmatmul.mubr.bf16.gmra.mrb[0].mxu0 %v1130
        %v1172 = vpop.f32.mrb[0].mxu0
        %v1173 = vadd.f32 %v1116, %v1172
        %v1174 = vpop.f32.mrb[0].mxu0
        %v1175 = vpop.f32.mrb[0].mxu0
        %v1176 = vadd.f32 %v1116, %v1175
        %v1177 = vpop.f32.mrb[0].mxu0
        %1178 = vmatprep.mubr.bf16.mxu0 0
        %1179 = vmatmul.mubr.bf16.gmra.mrb[0].mxu0 %v1133
        %v1180 = vpop.f32.mrb[0].mxu0
        %v1181 = vadd.f32 %v1116, %v1180
        %v1182 = vpop.f32.mrb[0].mxu0
        %v1183 = vpop.f32.mrb[0].mxu0
        %v1184 = vadd.f32 %v1116, %v1183
        %v1185 = vpop.f32.mrb[0].mxu0
        %1186 = vmatprep.mubr.bf16.mxu0 0
        %1187 = vmatmul.mubr.bf16.gmra.mrb[0].mxu0 %v1136
        %v1188 = vpop.f32.mrb[0].mxu0
        %v1189 = vadd.f32 %v1116, %v1188
        %v1190 = vpop.f32.mrb[0].mxu0
        %v1191 = vpop.f32.mrb[0].mxu0
        %v1192 = vadd.f32 %v1116, %v1191
        %v1193 = vpop.f32.mrb[0].mxu0
        %1194 = vdwg.mxu0
        %v1195 = vadd.f32 %v1173, %v530
        %v1196 = vadd.f32 %v1176, %v531
        %v1197 = vadd.f32 %v1181, %v532
        %v1198 = vadd.f32 %v1184, %v533
        %v1199 = vadd.f32 %v1189, %v534
        %v1200 = vadd.f32 %v1192, %v535
        %v1201 = vld [vmem:[%s3] sm:$0xf]
        %v1202 = vld [vmem:[%s3 + $0x4] sm:$0xf]
        %v1203 = vld [vmem:[%s3 + $0x8] sm:$0xf]
        %v1204 = vld [vmem:[%s3 + $0xc] sm:$0xf]
        %v1205 = vld [vmem:[%s5] sm:$0xf]
        %v1206 = vld [vmem:[%s5 + $0x4] sm:$0xf]
        %v1207 = vld [vmem:[%s5 + $0x8] sm:$0xf]
        %v1208 = vld [vmem:[%s5 + $0xc] sm:$0xf]
        %v1209 = vlaneseq
        %v1210 = vshrl.u32 %v1209, 7
        %v1211 = vsub.s32 1, %v1210
        %v1212 = vrot.slane %v522, %v1211
        %v1219 = vunpack.c.l.b16 %v536
        %v1220 = vunpack.c.l.b16 %v537
        %v1221 = vunpack.c.l.b16 %v538
        %v1222 = vunpack.c.l.b16 %v539
        %v1223 = vunpack.c.l.b16 %v540
        %v1224 = vunpack.c.l.b16 %v541
        %v1225 = vpack.c.b16 %v1220, %v1219
        %v1226 = vpack.c.b16 %v1222, %v1221
        %v1227 = vpack.c.b16 %v1224, %v1223
        %v1232 = vunpack.c.l.b16 %v1201
        %v1233 = vunpack.c.l.b16 %v1202
        %v1234 = vunpack.c.l.b16 %v1203
        %v1235 = vunpack.c.l.b16 %v1204
        %v1236 = vpack.c.b16 %v1233, %v1232
        %v1237 = vpack.c.b16 %v1235, %v1234
        %v1241 = vsel %vm587, %v1225, 0
        %v1244 = vsel %vm587, %v1226, 0
        %v1247 = vsel %vm587, %v1227, 0
        %1249 = vmatprep.subr.bf16.mxu0 0
        %1250 = vmatpush1.bf16.msra.mxu0 %v1236
        %1251 = vmatprep.subr.bf16.mxu0 0
        %1252 = vmatpush1.bf16.msra.mxu0 %v1237
        %1253 = vmatprep.subr.bf16.mxu0 0
        %1254 = vmatpush1.bf16.msra.mxu0 0
        %1255 = vmatprep.subr.bf16.mxu0 0
        %1256 = vmatpush1.bf16.msra.mxu0 0
        %1257 = vmatprep.subr.bf16.mxu0 0
        %1258 = vmatpush1.bf16.msra.mxu0 0
        %1259 = vmatprep.subr.bf16.mxu0 0
        %1260 = vmatpush1.bf16.msra.mxu0 0
        %1261 = vmatprep.subr.bf16.mxu0 0
        %1262 = vmatpush1.bf16.msra.mxu0 0
        %1263 = vmatprep.subr.bf16.mxu0 0
        %1264 = vmatpush1.bf16.msra.mxu0 0
        %1265 = vmatprep.subr.bf16.mxu0 0
        %1266 = vmatpush1.bf16.msra.mxu0 0
        %1267 = vmatprep.subr.bf16.mxu0 0
        %1268 = vmatpush1.bf16.msra.mxu0 0
        %1269 = vmatprep.subr.bf16.mxu0 0
        %1270 = vmatpush1.bf16.msra.mxu0 0
        %1271 = vmatprep.subr.bf16.mxu0 0
        %1272 = vmatpush1.bf16.msra.mxu0 0
        %1273 = vmatprep.subr.bf16.mxu0 0
        %1274 = vmatpush1.bf16.msra.mxu0 0
        %1275 = vmatprep.subr.bf16.mxu0 0
        %1276 = vmatpush1.bf16.msra.mxu0 0
        %1277 = vmatprep.subr.bf16.mxu0 0
        %1278 = vmatpush1.bf16.msra.mxu0 0
        %1279 = vmatprep.subr.bf16.mxu0 0
        %1280 = vmatpush1.bf16.msra.mxu0 0
        %1281 = vmatprep.mubr.bf16.mxu0 0
        %1282 = vmatmul.mubr.bf16.gmra.mrb[0].mxu0 %v1241
        %v1283 = vpop.f32.mrb[0].mxu0
        %v1284 = vadd.f32 %v1212, %v1283
        %v1285 = vpop.f32.mrb[0].mxu0
        %v1286 = vpop.f32.mrb[0].mxu0
        %v1287 = vadd.f32 %v1212, %v1286
        %v1288 = vpop.f32.mrb[0].mxu0
        %1289 = vmatprep.mubr.bf16.mxu0 0
        %1290 = vmatmul.mubr.bf16.gmra.mrb[0].mxu0 %v1244
        %v1291 = vpop.f32.mrb[0].mxu0
        %v1292 = vadd.f32 %v1212, %v1291
        %v1293 = vpop.f32.mrb[0].mxu0
        %v1294 = vpop.f32.mrb[0].mxu0
        %v1295 = vadd.f32 %v1212, %v1294
        %v1296 = vpop.f32.mrb[0].mxu0
        %1297 = vmatprep.mubr.bf16.mxu0 0
        %1298 = vmatmul.mubr.bf16.gmra.mrb[0].mxu0 %v1247
        %v1299 = vpop.f32.mrb[0].mxu0
        %v1300 = vadd.f32 %v1212, %v1299
        %v1301 = vpop.f32.mrb[0].mxu0
        %v1302 = vpop.f32.mrb[0].mxu0
        %v1303 = vadd.f32 %v1212, %v1302
        %v1304 = vpop.f32.mrb[0].mxu0
        %1305 = vdwg.mxu0
        %v1306 = vsel %vm654, %v1284, -inf
        %v1307 = vsel %vm654, %v1287, -inf
        %v1308 = vsel %vm654, %v1292, -inf
        %v1309 = vsel %vm654, %v1295, -inf
        %v1310 = vsel %vm654, %v1300, -inf
        %v1311 = vmax.f32 %v1306, %v1310
        %v1312 = vsel %vm654, %v1303, -inf
        %v1313 = vmax.f32 %v1307, %v1312
        %v1314 = vmax.f32 %v1311, %v1313
        %v1315 = vmax.f32 %v1308, %v1309
        %v1316 = vmax.f32 %v1314, %v1315
        %v1317 = vrot.slane %v1316, 4
        %v1318 = vmax.f32 %v1316, %v1317
        %v1319 = vrot.slane %v1318, 2
        %v1320 = vmax.f32 %v1318, %v1319
        %v1321 = vrot.slane %v1320, 1
        %v1322 = vmax.f32 %v1320, %v1321
        %v1323 = vsub.f32 %v1284, %v1322
        %v1324 = vsub.f32 %v1287, %v1322
        %v1325 = vsub.f32 %v1292, %v1322
        %v1326 = vsub.f32 %v1295, %v1322
        %v1327 = vsub.f32 %v1300, %v1322
        %v1328 = vsub.f32 %v1303, %v1322
        %v1329 = vmul.f32 %v1323, 1.442695
        %v1330 = vpow.pop %v1329
        %v1331 = vmul.f32 %v1324, 1.442695
        %v1332 = vpow.pop %v1331
        %v1333 = vmul.f32 %v1325, 1.442695
        %v1334 = vpow.pop %v1333
        %v1335 = vmul.f32 %v1326, 1.442695
        %v1336 = vpow.pop %v1335
        %v1337 = vmul.f32 %v1327, 1.442695
        %v1338 = vpow.pop %v1337
        %v1339 = vmul.f32 %v1328, 1.442695
        %v1340 = vpow.pop %v1339
        %v1341 = vsel %vm654, %v1330, 0.0
        %v1342 = vsel %vm654, %v1332, 0.0
        %v1343 = vadd.f32 %v1341, %v1342
        %v1344 = vsel %vm654, %v1334, 0.0
        %v1345 = vadd.f32 %v1343, %v1344
        %v1346 = vsel %vm654, %v1336, 0.0
        %v1347 = vadd.f32 %v1345, %v1346
        %v1348 = vsel %vm654, %v1338, 0.0
        %v1349 = vadd.f32 %v1347, %v1348
        %v1350 = vsel %vm654, %v1340, 0.0
        %v1351 = vadd.f32 %v1349, %v1350
        %v1352 = vrot.slane %v1351, 4
        %v1353 = vadd.f32 %v1351, %v1352
        %v1354 = vrot.slane %v1353, 2
        %v1355 = vadd.f32 %v1353, %v1354
        %v1356 = vrot.slane %v1355, 1
        %v1357 = vadd.f32 %v1355, %v1356
        %v1358 = vrcp.pop %v1357
        %v1359 = vmul.f32 %v1330, %v1358
        %v1360 = vmul.f32 %v1332, %v1358
        %v1361 = vmul.f32 %v1334, %v1358
        %v1362 = vmul.f32 %v1336, %v1358
        %v1363 = vmul.f32 %v1338, %v1358
        %v1364 = vmul.f32 %v1340, %v1358
        %v1365 = vsel %vm587, %v1284, -inf
        %1366 = vmax.xlane.f32.xlu0 %v1365
        %v1367 = vpop.xlane.xlu0 %1366
        %v1368 = vsel %vm587, %v1287, -inf
        %1369 = vmax.xlane.f32.xlu0 %v1368
        %v1370 = vpop.xlane.xlu0 %1369
        %v1371 = vsel %vm587, %v1292, -inf
        %1372 = vmax.xlane.f32.xlu0 %v1371
        %v1373 = vpop.xlane.xlu0 %1372
        %v1374 = vsel %vm587, %v1295, -inf
        %1375 = vmax.xlane.f32.xlu0 %v1374
        %v1376 = vpop.xlane.xlu0 %1375
        %v1377 = vsel %vm587, %v1300, -inf
        %1378 = vmax.xlane.f32.xlu0 %v1377
        %v1379 = vpop.xlane.xlu0 %1378
        %v1380 = vsel %vm587, %v1303, -inf
        %1381 = vmax.xlane.f32.xlu0 %v1380
        %v1382 = vpop.xlane.xlu0 %1381
        %v1383 = vsub.f32 %v1284, %v1367
        %v1384 = vsub.f32 %v1287, %v1370
        %v1385 = vsub.f32 %v1292, %v1373
        %v1386 = vsub.f32 %v1295, %v1376
        %v1387 = vsub.f32 %v1300, %v1379
        %v1388 = vsub.f32 %v1303, %v1382
        %v1389 = vmul.f32 %v1383, 1.442695
        %v1390 = vpow.pop %v1389
        %v1391 = vmul.f32 %v1384, 1.442695
        %v1392 = vpow.pop %v1391
        %v1393 = vmul.f32 %v1385, 1.442695
        %v1394 = vpow.pop %v1393
        %v1395 = vmul.f32 %v1386, 1.442695
        %v1396 = vpow.pop %v1395
        %v1397 = vmul.f32 %v1387, 1.442695
        %v1398 = vpow.pop %v1397
        %v1399 = vmul.f32 %v1388, 1.442695
        %v1400 = vpow.pop %v1399
        %v1401 = vpack.c.bf16 %v1392, %v1390
        %v1402 = vpack.c.bf16 %v1396, %v1394
        %v1403 = vpack.c.bf16 %v1400, %v1398
        %v1405 = vsel %vm587, %v1401, 0
        %v1408 = vsel %vm587, %v1402, 0
        %v1411 = vsel %vm587, %v1403, 0
        %1413 = vmatprep.subr.bf16.mxu0 0
        %1414 = vmatpush1.bf16.msra.mxu0 %v761
        %1415 = vmatprep.subr.bf16.mxu0 0
        %1416 = vmatpush1.bf16.msra.mxu0 %v762
        %1417 = vmatprep.subr.bf16.mxu0 0
        %1418 = vmatpush1.bf16.msra.mxu0 0
        %1419 = vmatprep.subr.bf16.mxu0 0
        %1420 = vmatpush1.bf16.msra.mxu0 0
        %1421 = vmatprep.subr.bf16.mxu0 0
        %1422 = vmatpush1.bf16.msra.mxu0 0
        %1423 = vmatprep.subr.bf16.mxu0 0
        %1424 = vmatpush1.bf16.msra.mxu0 0
        %1425 = vmatprep.subr.bf16.mxu0 0
        %1426 = vmatpush1.bf16.msra.mxu0 0
        %1427 = vmatprep.subr.bf16.mxu0 0
        %1428 = vmatpush1.bf16.msra.mxu0 0
        %1429 = vmatprep.subr.bf16.mxu0 0
        %1430 = vmatpush1.bf16.msra.mxu0 0
        %1431 = vmatprep.subr.bf16.mxu0 0
        %1432 = vmatpush1.bf16.msra.mxu0 0
        %1433 = vmatprep.subr.bf16.mxu0 0
        %1434 = vmatpush1.bf16.msra.mxu0 0
        %1435 = vmatprep.subr.bf16.mxu0 0
        %1436 = vmatpush1.bf16.msra.mxu0 0
        %1437 = vmatprep.subr.bf16.mxu0 0
        %1438 = vmatpush1.bf16.msra.mxu0 0
        %1439 = vmatprep.subr.bf16.mxu0 0
        %1440 = vmatpush1.bf16.msra.mxu0 0
        %1441 = vmatprep.subr.bf16.mxu0 0
        %1442 = vmatpush1.bf16.msra.mxu0 0
        %1443 = vmatprep.subr.bf16.mxu0 0
        %1444 = vmatpush1.bf16.msra.mxu0 0
        %1445 = vmatprep.mubr.bf16.mxu0 0
        %1446 = vmatmul.mubr.bf16.gmra.mrb[0].mxu0 %v1405
        %v1447 = vpop.f32.mrb[0].mxu0
        %v1448 = vadd.f32 0.0, %v1447
        %v1449 = vpop.f32.mrb[0].mxu0
        %v1450 = vpop.f32.mrb[0].mxu0
        %v1451 = vadd.f32 0.0, %v1450
        %v1452 = vpop.f32.mrb[0].mxu0
        %1453 = vmatprep.mubr.bf16.mxu0 0
        %1454 = vmatmul.mubr.bf16.gmra.mrb[0].mxu0 %v1408
        %v1455 = vpop.f32.mrb[0].mxu0
        %v1456 = vadd.f32 0.0, %v1455
        %v1457 = vpop.f32.mrb[0].mxu0
        %v1458 = vpop.f32.mrb[0].mxu0
        %v1459 = vadd.f32 0.0, %v1458
        %v1460 = vpop.f32.mrb[0].mxu0
        %1461 = vmatprep.mubr.bf16.mxu0 0
        %1462 = vmatmul.mubr.bf16.gmra.mrb[0].mxu0 %v1411
        %v1463 = vpop.f32.mrb[0].mxu0
        %v1464 = vadd.f32 0.0, %v1463
        %v1465 = vpop.f32.mrb[0].mxu0
        %v1466 = vpop.f32.mrb[0].mxu0
        %v1467 = vadd.f32 0.0, %v1466
        %v1468 = vpop.f32.mrb[0].mxu0
        %1469 = vdwg.mxu0
        %v1470 = vpack.c.bf16 %v1451, %v1448
        %v1471 = vpack.c.bf16 %v1459, %v1456
        %v1472 = vpack.c.bf16 %v1467, %v1464
        %v1474 = vsel %vm834, %v1470, 0
        %v1477 = vsel %vm834, %v1471, 0
        %v1480 = vsel %vm834, %v1472, 0
        %1482 = vmatprep.subr.bf16.mxu0 0
        %1483 = vmatpush1.bf16.msra.mxu0 %v846
        %1484 = vmatprep.subr.bf16.mxu0 0
        %1485 = vmatpush1.bf16.msra.mxu0 0
        %1486 = vmatprep.subr.bf16.mxu0 0
        %1487 = vmatpush1.bf16.msra.mxu0 0
        %1488 = vmatprep.subr.bf16.mxu0 0
        %1489 = vmatpush1.bf16.msra.mxu0 0
        %1490 = vmatprep.subr.bf16.mxu0 0
        %1491 = vmatpush1.bf16.msra.mxu0 0
        %1492 = vmatprep.subr.bf16.mxu0 0
        %1493 = vmatpush1.bf16.msra.mxu0 0
        %1494 = vmatprep.subr.bf16.mxu0 0
        %1495 = vmatpush1.bf16.msra.mxu0 0
        %1496 = vmatprep.subr.bf16.mxu0 0
        %1497 = vmatpush1.bf16.msra.mxu0 0
        %1498 = vmatprep.subr.bf16.mxu0 0
        %1499 = vmatpush1.bf16.msra.mxu0 0
        %1500 = vmatprep.subr.bf16.mxu0 0
        %1501 = vmatpush1.bf16.msra.mxu0 0
        %1502 = vmatprep.subr.bf16.mxu0 0
        %1503 = vmatpush1.bf16.msra.mxu0 0
        %1504 = vmatprep.subr.bf16.mxu0 0
        %1505 = vmatpush1.bf16.msra.mxu0 0
        %1506 = vmatprep.subr.bf16.mxu0 0
        %1507 = vmatpush1.bf16.msra.mxu0 0
        %1508 = vmatprep.subr.bf16.mxu0 0
        %1509 = vmatpush1.bf16.msra.mxu0 0
        %1510 = vmatprep.subr.bf16.mxu0 0
        %1511 = vmatpush1.bf16.msra.mxu0 0
        %1512 = vmatprep.subr.bf16.mxu0 0
        %1513 = vmatpush1.bf16.msra.mxu0 0
        %1514 = vmatprep.mubr.bf16.mxu0 0
        %1515 = vmatmul.mubr.bf16.gmra.mrb[0].mxu0 %v1474
        %v1516 = vpop.f32.mrb[0].mxu0
        %v1517 = vadd.f32 0.0, %v1516
        %v1518 = vpop.f32.mrb[0].mxu0
        %v1519 = vpop.f32.mrb[0].mxu0
        %v1520 = vadd.f32 0.0, %v1519
        %v1521 = vpop.f32.mrb[0].mxu0
        %1522 = vmatprep.mubr.bf16.mxu0 0
        %1523 = vmatmul.mubr.bf16.gmra.mrb[0].mxu0 %v1477
        %v1524 = vpop.f32.mrb[0].mxu0
        %v1525 = vadd.f32 0.0, %v1524
        %v1526 = vpop.f32.mrb[0].mxu0
        %v1527 = vpop.f32.mrb[0].mxu0
        %v1528 = vadd.f32 0.0, %v1527
        %v1529 = vpop.f32.mrb[0].mxu0
        %1530 = vmatprep.mubr.bf16.mxu0 0
        %1531 = vmatmul.mubr.bf16.gmra.mrb[0].mxu0 %v1480
        %v1532 = vpop.f32.mrb[0].mxu0
        %v1533 = vadd.f32 0.0, %v1532
        %v1534 = vpop.f32.mrb[0].mxu0
        %v1535 = vpop.f32.mrb[0].mxu0
        %v1536 = vadd.f32 0.0, %v1535
        %v1537 = vpop.f32.mrb[0].mxu0
        %1538 = vdwg.mxu0
        %v1539 = vmax.f32 %v1517, 1e-20
        %v1540 = vmax.f32 %v1520, 1e-20
        %v1541 = vmax.f32 %v1525, 1e-20
        %v1542 = vmax.f32 %v1528, 1e-20
        %v1543 = vmax.f32 %v1533, 1e-20
        %v1544 = vmax.f32 %v1536, 1e-20
        %v1545 = vrcp.pop %v1539
        %v1546 = vrcp.pop %v1540
        %v1547 = vrcp.pop %v1541
        %v1548 = vrcp.pop %v1542
        %v1549 = vrcp.pop %v1543
        %v1550 = vrcp.pop %v1544
        %v1551 = vmul.f32 %v1390, %v1545
        %v1552 = vmul.f32 %v1392, %v1546
        %v1553 = vmul.f32 %v1394, %v1547
        %v1554 = vmul.f32 %v1396, %v1548
        %v1555 = vmul.f32 %v1398, %v1549
        %v1556 = vmul.f32 %v1400, %v1550
        %v1557 = vpack.c.bf16 %v1360, %v1359
        %v1558 = vpack.c.bf16 %v1362, %v1361
        %v1559 = vpack.c.bf16 %v1364, %v1363
        %v1560 = vpack.c.bf16 %v1287, %v1284
        %v1561 = vpack.c.bf16 %v1295, %v1292
        %v1562 = vpack.c.bf16 %v1303, %v1300
        %1566 = vrot.lane.b32.xlu0 %v1557, 96
        %v1567 = vpop.permute.xlu0 %1566
        %1568 = vrot.lane.b32.xlu0 %v1558, 96
        %v1569 = vpop.permute.xlu0 %1568
        %1570 = vrot.lane.b32.xlu0 %v1559, 96
        %v1571 = vpop.permute.xlu0 %1570
        %1575 = vxpose.xlu0.c.b16.start [1/8] %v1567, 128
        %1576 = vxpose.xlu0.c.b16.cont [2/8] %v1569, 128
        %1577 = vxpose.xlu0.c.b16.cont [3/8] %v1571, 128
        %1578 = vxpose.xlu0.c.b16.cont [4/8] 0, 128
        %1579 = vxpose.xlu0.c.b16.cont [5/8] 0, 128
        %1580 = vxpose.xlu0.c.b16.cont [6/8] 0, 128
        %1581 = vxpose.xlu0.c.b16.cont [7/8] 0, 128
        %1582 = vxpose.xlu0.c.b16.end [8/8] 0, 128
        %v1583 = vpop.trf.xlu0
        %v1584 = vpop.trf.xlu0
        %v1585 = vpop.trf.xlu0
        %v1586 = vpop.trf.xlu0
        %v1587 = vpop.trf.xlu0
        %v1588 = vpop.trf.xlu0
        %v1589 = vpop.trf.xlu0
        %v1590 = vpop.trf.xlu0
        %1594 = vrot.lane.b32.xlu0 %v1560, 64
        %v1595 = vpop.permute.xlu0 %1594
        %1596 = vrot.lane.b32.xlu0 %v1561, 64
        %v1597 = vpop.permute.xlu0 %1596
        %1598 = vrot.lane.b32.xlu0 %v1562, 64
        %v1599 = vpop.permute.xlu0 %1598
        %v1604 = vsel %vm969, %v1583, 0
        %v1607 = vsel %vm969, %v1584, 0
        %1609 = vmatprep.subr.bf16.mxu0 0
        %1610 = vmatpush1.bf16.msra.mxu0 %v1595
        %1611 = vmatprep.subr.bf16.mxu0 0
        %1612 = vmatpush1.bf16.msra.mxu0 %v1597
        %1613 = vmatprep.subr.bf16.mxu0 0
        %1614 = vmatpush1.bf16.msra.mxu0 %v1599
        %1615 = vmatprep.subr.bf16.mxu0 0
        %1616 = vmatpush1.bf16.msra.mxu0 0
        %1617 = vmatprep.subr.bf16.mxu0 0
        %1618 = vmatpush1.bf16.msra.mxu0 0
        %1619 = vmatprep.subr.bf16.mxu0 0
        %1620 = vmatpush1.bf16.msra.mxu0 0
        %1621 = vmatprep.subr.bf16.mxu0 0
        %1622 = vmatpush1.bf16.msra.mxu0 0
        %1623 = vmatprep.subr.bf16.mxu0 0
        %1624 = vmatpush1.bf16.msra.mxu0 0
        %1625 = vmatprep.subr.bf16.mxu0 0
        %1626 = vmatpush1.bf16.msra.mxu0 0
        %1627 = vmatprep.subr.bf16.mxu0 0
        %1628 = vmatpush1.bf16.msra.mxu0 0
        %1629 = vmatprep.subr.bf16.mxu0 0
        %1630 = vmatpush1.bf16.msra.mxu0 0
        %1631 = vmatprep.subr.bf16.mxu0 0
        %1632 = vmatpush1.bf16.msra.mxu0 0
        %1633 = vmatprep.subr.bf16.mxu0 0
        %1634 = vmatpush1.bf16.msra.mxu0 0
        %1635 = vmatprep.subr.bf16.mxu0 0
        %1636 = vmatpush1.bf16.msra.mxu0 0
        %1637 = vmatprep.subr.bf16.mxu0 0
        %1638 = vmatpush1.bf16.msra.mxu0 0
        %1639 = vmatprep.subr.bf16.mxu0 0
        %1640 = vmatpush1.bf16.msra.mxu0 0
        %1641 = vmatprep.mubr.bf16.mxu0 0
        %1642 = vmatmul.mubr.bf16.gmra.mrb[0].mxu0 %v1604
        %v1643 = vpop.f32.mrb[0].mxu0
        %v1644 = vadd.f32 0.0, %v1643
        %v1645 = vpop.f32.mrb[0].mxu0
        %v1646 = vpop.f32.mrb[0].mxu0
        %v1647 = vadd.f32 0.0, %v1646
        %v1648 = vpop.f32.mrb[0].mxu0
        %1649 = vmatprep.mubr.bf16.mxu0 0
        %1650 = vmatmul.mubr.bf16.gmra.mrb[0].mxu0 %v1607
        %v1651 = vpop.f32.mrb[0].mxu0
        %v1652 = vadd.f32 0.0, %v1651
        %v1653 = vpop.f32.mrb[0].mxu0
        %v1654 = vpop.f32.mrb[0].mxu0
        %v1655 = vadd.f32 0.0, %v1654
        %v1656 = vpop.f32.mrb[0].mxu0
        %1657 = vdwg.mxu0
        %v1658 = vpack.c.bf16 %v1647, %v1644
        %v1659 = vpack.c.bf16 %v1655, %v1652
        %v1660 = vmul.bf16 %v1658, %v1035
        %v1661 = vmul.bf16 %v1659, %v1036
        %v1662 = vpack.c.bf16 %v1552, %v1551
        %v1663 = vpack.c.bf16 %v1554, %v1553
        %v1664 = vpack.c.bf16 %v1556, %v1555
        %v1666 = vsel %vm587, %v1662, 0
        %v1669 = vsel %vm587, %v1663, 0
        %v1672 = vsel %vm587, %v1664, 0
        %1674 = vmatprep.subr.bf16.mxu0 0
        %1675 = vmatpush1.bf16.msra.mxu0 %v1660
        %1676 = vmatprep.subr.bf16.mxu0 0
        %1677 = vmatpush1.bf16.msra.mxu0 %v1661
        %1678 = vmatprep.subr.bf16.mxu0 0
        %1679 = vmatpush1.bf16.msra.mxu0 0
        %1680 = vmatprep.subr.bf16.mxu0 0
        %1681 = vmatpush1.bf16.msra.mxu0 0
        %1682 = vmatprep.subr.bf16.mxu0 0
        %1683 = vmatpush1.bf16.msra.mxu0 0
        %1684 = vmatprep.subr.bf16.mxu0 0
        %1685 = vmatpush1.bf16.msra.mxu0 0
        %1686 = vmatprep.subr.bf16.mxu0 0
        %1687 = vmatpush1.bf16.msra.mxu0 0
        %1688 = vmatprep.subr.bf16.mxu0 0
        %1689 = vmatpush1.bf16.msra.mxu0 0
        %1690 = vmatprep.subr.bf16.mxu0 0
        %1691 = vmatpush1.bf16.msra.mxu0 0
        %1692 = vmatprep.subr.bf16.mxu0 0
        %1693 = vmatpush1.bf16.msra.mxu0 0
        %1694 = vmatprep.subr.bf16.mxu0 0
        %1695 = vmatpush1.bf16.msra.mxu0 0
        %1696 = vmatprep.subr.bf16.mxu0 0
        %1697 = vmatpush1.bf16.msra.mxu0 0
        %1698 = vmatprep.subr.bf16.mxu0 0
        %1699 = vmatpush1.bf16.msra.mxu0 0
        %1700 = vmatprep.subr.bf16.mxu0 0
        %1701 = vmatpush1.bf16.msra.mxu0 0
        %1702 = vmatprep.subr.bf16.mxu0 0
        %1703 = vmatpush1.bf16.msra.mxu0 0
        %1704 = vmatprep.subr.bf16.mxu0 0
        %1705 = vmatpush1.bf16.msra.mxu0 0
        %1706 = vmatprep.mubr.bf16.mxu0 0
        %1707 = vmatmul.mubr.bf16.gmra.mrb[0].mxu0 %v1666
        %v1708 = vpop.f32.mrb[0].mxu0
        %v1709 = vadd.f32 0.0, %v1708
        %v1710 = vpop.f32.mrb[0].mxu0
        %v1711 = vpop.f32.mrb[0].mxu0
        %v1712 = vadd.f32 0.0, %v1711
        %v1713 = vpop.f32.mrb[0].mxu0
        %1714 = vmatprep.mubr.bf16.mxu0 0
        %1715 = vmatmul.mubr.bf16.gmra.mrb[0].mxu0 %v1669
        %v1716 = vpop.f32.mrb[0].mxu0
        %v1717 = vadd.f32 0.0, %v1716
        %v1718 = vpop.f32.mrb[0].mxu0
        %v1719 = vpop.f32.mrb[0].mxu0
        %v1720 = vadd.f32 0.0, %v1719
        %v1721 = vpop.f32.mrb[0].mxu0
        %1722 = vmatprep.mubr.bf16.mxu0 0
        %1723 = vmatmul.mubr.bf16.gmra.mrb[0].mxu0 %v1672
        %v1724 = vpop.f32.mrb[0].mxu0
        %v1725 = vadd.f32 0.0, %v1724
        %v1726 = vpop.f32.mrb[0].mxu0
        %v1727 = vpop.f32.mrb[0].mxu0
        %v1728 = vadd.f32 0.0, %v1727
        %v1729 = vpop.f32.mrb[0].mxu0
        %1730 = vdwg.mxu0
        %v1731 = vpack.c.bf16 %v1712, %v1709
        %v1732 = vpack.c.bf16 %v1720, %v1717
        %v1733 = vpack.c.bf16 %v1728, %v1725
        %v1734 = vlaneseq
        %v1735 = vshrl.u32 %v1734, 7
        %v1736 = vsub.s32 1, %v1735
        %v1737 = vrot.slane %v523, %v1736
        %v1742 = vunpack.c.l.b16 %v1205
        %v1743 = vunpack.c.l.b16 %v1206
        %v1744 = vunpack.c.l.b16 %v1207
        %v1745 = vunpack.c.l.b16 %v1208
        %v1746 = vpack.c.b16 %v1743, %v1742
        %v1747 = vpack.c.b16 %v1745, %v1744
        %v1751 = vsel %vm587, %v1731, 0
        %v1754 = vsel %vm587, %v1732, 0
        %v1757 = vsel %vm587, %v1733, 0
        %1759 = vmatprep.subr.bf16.mxu0 0
        %1760 = vmatpush1.bf16.msra.mxu0 %v1746
        %1761 = vmatprep.subr.bf16.mxu0 0
        %1762 = vmatpush1.bf16.msra.mxu0 %v1747
        %1763 = vmatprep.subr.bf16.mxu0 0
        %1764 = vmatpush1.bf16.msra.mxu0 0
        %1765 = vmatprep.subr.bf16.mxu0 0
        %1766 = vmatpush1.bf16.msra.mxu0 0
        %1767 = vmatprep.subr.bf16.mxu0 0
        %1768 = vmatpush1.bf16.msra.mxu0 0
        %1769 = vmatprep.subr.bf16.mxu0 0
        %1770 = vmatpush1.bf16.msra.mxu0 0
        %1771 = vmatprep.subr.bf16.mxu0 0
        %1772 = vmatpush1.bf16.msra.mxu0 0
        %1773 = vmatprep.subr.bf16.mxu0 0
        %1774 = vmatpush1.bf16.msra.mxu0 0
        %1775 = vmatprep.subr.bf16.mxu0 0
        %1776 = vmatpush1.bf16.msra.mxu0 0
        %1777 = vmatprep.subr.bf16.mxu0 0
        %1778 = vmatpush1.bf16.msra.mxu0 0
        %1779 = vmatprep.subr.bf16.mxu0 0
        %1780 = vmatpush1.bf16.msra.mxu0 0
        %1781 = vmatprep.subr.bf16.mxu0 0
        %1782 = vmatpush1.bf16.msra.mxu0 0
        %1783 = vmatprep.subr.bf16.mxu0 0
        %1784 = vmatpush1.bf16.msra.mxu0 0
        %1785 = vmatprep.subr.bf16.mxu0 0
        %1786 = vmatpush1.bf16.msra.mxu0 0
        %1787 = vmatprep.subr.bf16.mxu0 0
        %1788 = vmatpush1.bf16.msra.mxu0 0
        %1789 = vmatprep.subr.bf16.mxu0 0
        %1790 = vmatpush1.bf16.msra.mxu0 0
        %1791 = vmatprep.mubr.bf16.mxu0 0
        %1792 = vmatmul.mubr.bf16.gmra.mrb[0].mxu0 %v1751
        %v1793 = vpop.f32.mrb[0].mxu0
        %v1794 = vadd.f32 %v1737, %v1793
        %v1795 = vpop.f32.mrb[0].mxu0
        %v1796 = vpop.f32.mrb[0].mxu0
        %v1797 = vadd.f32 %v1737, %v1796
        %v1798 = vpop.f32.mrb[0].mxu0
        %1799 = vmatprep.mubr.bf16.mxu0 0
        %1800 = vmatmul.mubr.bf16.gmra.mrb[0].mxu0 %v1754
        %v1801 = vpop.f32.mrb[0].mxu0
        %v1802 = vadd.f32 %v1737, %v1801
        %v1803 = vpop.f32.mrb[0].mxu0
        %v1804 = vpop.f32.mrb[0].mxu0
        %v1805 = vadd.f32 %v1737, %v1804
        %v1806 = vpop.f32.mrb[0].mxu0
        %1807 = vmatprep.mubr.bf16.mxu0 0
        %1808 = vmatmul.mubr.bf16.gmra.mrb[0].mxu0 %v1757
        %v1809 = vpop.f32.mrb[0].mxu0
        %v1810 = vadd.f32 %v1737, %v1809
        %v1811 = vpop.f32.mrb[0].mxu0
        %v1812 = vpop.f32.mrb[0].mxu0
        %v1813 = vadd.f32 %v1737, %v1812
        %v1814 = vpop.f32.mrb[0].mxu0
        %1815 = vdwg.mxu0
        %v1816 = vadd.f32 %v1794, %v542
        %v1817 = vadd.f32 %v1797, %v543
        %v1818 = vadd.f32 %v1802, %v544
        %v1819 = vadd.f32 %v1805, %v545
        %v1820 = vadd.f32 %v1810, %v546
        %v1821 = vadd.f32 %v1813, %v547
        %v1822 = vadd.f32 %v1195, %v1816
        %v1823 = vadd.f32 %v1196, %v1817
        %v1824 = vadd.f32 %v1197, %v1818
        %v1825 = vadd.f32 %v1198, %v1819
        %v1826 = vadd.f32 %v1199, %v1820
        %v1827 = vadd.f32 %v1200, %v1821
        %v1828 = vld [vmem:[%s6] sm:$0xf]
        %v1829 = vld [vmem:[%s6 + $0x4] sm:$0xf]
        %v1830 = vld [vmem:[%s6 + $0x8] sm:$0xf]
        %v1831 = vld [vmem:[%s6 + $0xc] sm:$0xf]
        %v1832 = vld [vmem:[%s7] sm:$0xf]
        %v1833 = vld [vmem:[%s7 + $0x4] sm:$0xf]
        %v1834 = vld [vmem:[%s7 + $0x8] sm:$0xf]
        %v1835 = vld [vmem:[%s7 + $0xc] sm:$0xf]
        %v1836 = vpack.c.bf16 %v1823, %v1822
        %v1837 = vpack.c.bf16 %v1825, %v1824
        %v1838 = vpack.c.bf16 %v1827, %v1826
        %v1839 = vlaneseq
        %v1840 = vshrl.u32 %v1839, 7
        %v1841 = vsub.s32 2, %v1840
        %v1842 = vrot.slane %v523, %v1841
        %v1847 = vunpack.c.l.b16 %v1828
        %v1848 = vunpack.c.l.b16 %v1829
        %v1849 = vunpack.c.l.b16 %v1830
        %v1850 = vunpack.c.l.b16 %v1831
        %v1851 = vpack.c.b16 %v1848, %v1847
        %v1852 = vpack.c.b16 %v1850, %v1849
        %v1856 = vsel %vm587, %v1836, 0
        %v1859 = vsel %vm587, %v1837, 0
        %v1862 = vsel %vm587, %v1838, 0
        %1864 = vmatprep.subr.bf16.mxu0 0
        %1865 = vmatpush1.bf16.msra.mxu0 %v1851
        %1866 = vmatprep.subr.bf16.mxu0 0
        %1867 = vmatpush1.bf16.msra.mxu0 %v1852
        %1868 = vmatprep.subr.bf16.mxu0 0
        %1869 = vmatpush1.bf16.msra.mxu0 0
        %1870 = vmatprep.subr.bf16.mxu0 0
        %1871 = vmatpush1.bf16.msra.mxu0 0
        %1872 = vmatprep.subr.bf16.mxu0 0
        %1873 = vmatpush1.bf16.msra.mxu0 0
        %1874 = vmatprep.subr.bf16.mxu0 0
        %1875 = vmatpush1.bf16.msra.mxu0 0
        %1876 = vmatprep.subr.bf16.mxu0 0
        %1877 = vmatpush1.bf16.msra.mxu0 0
        %1878 = vmatprep.subr.bf16.mxu0 0
        %1879 = vmatpush1.bf16.msra.mxu0 0
        %1880 = vmatprep.subr.bf16.mxu0 0
        %1881 = vmatpush1.bf16.msra.mxu0 0
        %1882 = vmatprep.subr.bf16.mxu0 0
        %1883 = vmatpush1.bf16.msra.mxu0 0
        %1884 = vmatprep.subr.bf16.mxu0 0
        %1885 = vmatpush1.bf16.msra.mxu0 0
        %1886 = vmatprep.subr.bf16.mxu0 0
        %1887 = vmatpush1.bf16.msra.mxu0 0
        %1888 = vmatprep.subr.bf16.mxu0 0
        %1889 = vmatpush1.bf16.msra.mxu0 0
        %1890 = vmatprep.subr.bf16.mxu0 0
        %1891 = vmatpush1.bf16.msra.mxu0 0
        %1892 = vmatprep.subr.bf16.mxu0 0
        %1893 = vmatpush1.bf16.msra.mxu0 0
        %1894 = vmatprep.subr.bf16.mxu0 0
        %1895 = vmatpush1.bf16.msra.mxu0 0
        %1896 = vmatprep.mubr.bf16.mxu0 0
        %1897 = vmatmul.mubr.bf16.gmra.mrb[0].mxu0 %v1856
        %v1898 = vpop.f32.mrb[0].mxu0
        %v1899 = vadd.f32 %v1842, %v1898
        %v1900 = vpop.f32.mrb[0].mxu0
        %v1901 = vpop.f32.mrb[0].mxu0
        %v1902 = vadd.f32 %v1842, %v1901
        %v1903 = vpop.f32.mrb[0].mxu0
        %1904 = vmatprep.mubr.bf16.mxu0 0
        %1905 = vmatmul.mubr.bf16.gmra.mrb[0].mxu0 %v1859
        %v1906 = vpop.f32.mrb[0].mxu0
        %v1907 = vadd.f32 %v1842, %v1906
        %v1908 = vpop.f32.mrb[0].mxu0
        %v1909 = vpop.f32.mrb[0].mxu0
        %v1910 = vadd.f32 %v1842, %v1909
        %v1911 = vpop.f32.mrb[0].mxu0
        %1912 = vmatprep.mubr.bf16.mxu0 0
        %1913 = vmatmul.mubr.bf16.gmra.mrb[0].mxu0 %v1862
        %v1914 = vpop.f32.mrb[0].mxu0
        %v1915 = vadd.f32 %v1842, %v1914
        %v1916 = vpop.f32.mrb[0].mxu0
        %v1917 = vpop.f32.mrb[0].mxu0
        %v1918 = vadd.f32 %v1842, %v1917
        %v1919 = vpop.f32.mrb[0].mxu0
        %1920 = vdwg.mxu0
        %v1921 = vmax.f32 %v1899, 0.0
        %v1922 = vmax.f32 %v1902, 0.0
        %v1923 = vmax.f32 %v1907, 0.0
        %v1924 = vmax.f32 %v1910, 0.0
        %v1925 = vmax.f32 %v1915, 0.0
        %v1926 = vmax.f32 %v1918, 0.0
        %v1927 = vpack.c.bf16 %v1922, %v1921
        %v1928 = vpack.c.bf16 %v1924, %v1923
        %v1929 = vpack.c.bf16 %v1926, %v1925
        %v1930 = vlaneseq
        %v1931 = vshrl.u32 %v1930, 7
        %v1932 = vsub.s32 3, %v1931
        %v1933 = vrot.slane %v523, %v1932
        %v1938 = vunpack.c.l.b16 %v1832
        %v1939 = vunpack.c.l.b16 %v1833
        %v1940 = vunpack.c.l.b16 %v1834
        %v1941 = vunpack.c.l.b16 %v1835
        %v1942 = vpack.c.b16 %v1939, %v1938
        %v1943 = vpack.c.b16 %v1941, %v1940
        %v1947 = vsel %vm587, %v1927, 0
        %v1950 = vsel %vm587, %v1928, 0
        %v1953 = vsel %vm587, %v1929, 0
        %1955 = vmatprep.subr.bf16.mxu0 0
        %1956 = vmatpush1.bf16.msra.mxu0 %v1942
        %1957 = vmatprep.subr.bf16.mxu0 0
        %1958 = vmatpush1.bf16.msra.mxu0 %v1943
        %1959 = vmatprep.subr.bf16.mxu0 0
        %1960 = vmatpush1.bf16.msra.mxu0 0
        %1961 = vmatprep.subr.bf16.mxu0 0
        %1962 = vmatpush1.bf16.msra.mxu0 0
        %1963 = vmatprep.subr.bf16.mxu0 0
        %1964 = vmatpush1.bf16.msra.mxu0 0
        %1965 = vmatprep.subr.bf16.mxu0 0
        %1966 = vmatpush1.bf16.msra.mxu0 0
        %1967 = vmatprep.subr.bf16.mxu0 0
        %1968 = vmatpush1.bf16.msra.mxu0 0
        %1969 = vmatprep.subr.bf16.mxu0 0
        %1970 = vmatpush1.bf16.msra.mxu0 0
        %1971 = vmatprep.subr.bf16.mxu0 0
        %1972 = vmatpush1.bf16.msra.mxu0 0
        %1973 = vmatprep.subr.bf16.mxu0 0
        %1974 = vmatpush1.bf16.msra.mxu0 0
        %1975 = vmatprep.subr.bf16.mxu0 0
        %1976 = vmatpush1.bf16.msra.mxu0 0
        %1977 = vmatprep.subr.bf16.mxu0 0
        %1978 = vmatpush1.bf16.msra.mxu0 0
        %1979 = vmatprep.subr.bf16.mxu0 0
        %1980 = vmatpush1.bf16.msra.mxu0 0
        %1981 = vmatprep.subr.bf16.mxu0 0
        %1982 = vmatpush1.bf16.msra.mxu0 0
        %1983 = vmatprep.subr.bf16.mxu0 0
        %1984 = vmatpush1.bf16.msra.mxu0 0
        %1985 = vmatprep.subr.bf16.mxu0 0
        %1986 = vmatpush1.bf16.msra.mxu0 0
        %1987 = vmatprep.mubr.bf16.mxu0 0
        %1988 = vmatmul.mubr.bf16.gmra.mrb[0].mxu0 %v1947
        %v1989 = vpop.f32.mrb[0].mxu0
        %v1990 = vadd.f32 %v1933, %v1989
        %v1991 = vpop.f32.mrb[0].mxu0
        %v1992 = vpop.f32.mrb[0].mxu0
        %v1993 = vadd.f32 %v1933, %v1992
        %v1994 = vpop.f32.mrb[0].mxu0
        %1995 = vmatprep.mubr.bf16.mxu0 0
        %1996 = vmatmul.mubr.bf16.gmra.mrb[0].mxu0 %v1950
        %v1997 = vpop.f32.mrb[0].mxu0
        %v1998 = vadd.f32 %v1933, %v1997
        %v1999 = vpop.f32.mrb[0].mxu0
        %v2000 = vpop.f32.mrb[0].mxu0
        %v2001 = vadd.f32 %v1933, %v2000
        %v2002 = vpop.f32.mrb[0].mxu0
        %2003 = vmatprep.mubr.bf16.mxu0 0
        %2004 = vmatmul.mubr.bf16.gmra.mrb[0].mxu0 %v1953
        %v2005 = vpop.f32.mrb[0].mxu0
        %v2006 = vadd.f32 %v1933, %v2005
        %v2007 = vpop.f32.mrb[0].mxu0
        %v2008 = vpop.f32.mrb[0].mxu0
        %v2009 = vadd.f32 %v1933, %v2008
        %v2010 = vpop.f32.mrb[0].mxu0
        %2011 = vdwg.mxu0
        %v2012 = vadd.f32 %v1990, %v1822
        %v2013 = vadd.f32 %v1993, %v1823
        %v2014 = vadd.f32 %v1998, %v1824
        %v2015 = vadd.f32 %v2001, %v1825
        %v2016 = vadd.f32 %v2006, %v1826
        %v2017 = vadd.f32 %v2009, %v1827
        %v2018 = vsel %vm587, %v2012, 0.0
        %2019 = vadd.xlane.f32.xlu0 %v2018
        %v2020 = vpop.xlane.xlu0 %2019
        %v2021 = vsel %vm587, %v2013, 0.0
        %2022 = vadd.xlane.f32.xlu0 %v2021
        %v2023 = vpop.xlane.xlu0 %2022
        %v2024 = vsel %vm587, %v2014, 0.0
        %2025 = vadd.xlane.f32.xlu0 %v2024
        %v2026 = vpop.xlane.xlu0 %2025
        %v2027 = vsel %vm587, %v2015, 0.0
        %2028 = vadd.xlane.f32.xlu0 %v2027
        %v2029 = vpop.xlane.xlu0 %2028
        %v2030 = vsel %vm587, %v2016, 0.0
        %2031 = vadd.xlane.f32.xlu0 %v2030
        %v2032 = vpop.xlane.xlu0 %2031
        %v2033 = vsel %vm587, %v2017, 0.0
        %2034 = vadd.xlane.f32.xlu0 %v2033
        %v2035 = vpop.xlane.xlu0 %2034
        %v2036 = vrcp.pop 32.0
        %v2037 = vmul.f32 %v2020, %v2036
        %v2038 = vmul.f32 %v2023, %v2036
        %v2039 = vmul.f32 %v2026, %v2036
        %v2040 = vmul.f32 %v2029, %v2036
        %v2041 = vmul.f32 %v2032, %v2036
        %v2042 = vmul.f32 %v2035, %v2036
        %v2043 = vsub.f32 %v2012, %v2037
        %v2044 = vsub.f32 %v2013, %v2038
        %v2045 = vsub.f32 %v2014, %v2039
        %v2046 = vsub.f32 %v2015, %v2040
        %v2047 = vsub.f32 %v2016, %v2041
        %v2048 = vsub.f32 %v2017, %v2042
        %v2049 = vmul.f32 %v2043, %v2043
        %v2050 = vmul.f32 %v2044, %v2044
        %v2051 = vmul.f32 %v2045, %v2045
        %v2052 = vmul.f32 %v2046, %v2046
        %v2053 = vmul.f32 %v2047, %v2047
        %v2054 = vmul.f32 %v2048, %v2048
        %v2055 = vsel %vm587, %v2049, 0.0
        %2056 = vadd.xlane.f32.xlu0 %v2055
        %v2057 = vpop.xlane.xlu0 %2056
        %v2058 = vsel %vm587, %v2050, 0.0
        %2059 = vadd.xlane.f32.xlu0 %v2058
        %v2060 = vpop.xlane.xlu0 %2059
        %v2061 = vsel %vm587, %v2051, 0.0
        %2062 = vadd.xlane.f32.xlu0 %v2061
        %v2063 = vpop.xlane.xlu0 %2062
        %v2064 = vsel %vm587, %v2052, 0.0
        %2065 = vadd.xlane.f32.xlu0 %v2064
        %v2066 = vpop.xlane.xlu0 %2065
        %v2067 = vsel %vm587, %v2053, 0.0
        %2068 = vadd.xlane.f32.xlu0 %v2067
        %v2069 = vpop.xlane.xlu0 %2068
        %v2070 = vsel %vm587, %v2054, 0.0
        %2071 = vadd.xlane.f32.xlu0 %v2070
        %v2072 = vpop.xlane.xlu0 %2071
        %v2073 = vmul.f32 %v2057, %v2036
        %v2074 = vmul.f32 %v2060, %v2036
        %v2075 = vmul.f32 %v2063, %v2036
        %v2076 = vmul.f32 %v2066, %v2036
        %v2077 = vmul.f32 %v2069, %v2036
        %v2078 = vmul.f32 %v2072, %v2036
        %v2079 = vadd.f32 %v2073, 1e-05
        %v2080 = vadd.f32 %v2074, 1e-05
        %v2081 = vadd.f32 %v2075, 1e-05
        %v2082 = vadd.f32 %v2076, 1e-05
        %v2083 = vadd.f32 %v2077, 1e-05
        %v2084 = vadd.f32 %v2078, 1e-05
        %v2085 = vrsqrt.pop %v2079
        %v2086 = vrsqrt.pop %v2080
        %v2087 = vrsqrt.pop %v2081
        %v2088 = vrsqrt.pop %v2082
        %v2089 = vrsqrt.pop %v2083
        %v2090 = vrsqrt.pop %v2084
        %v2091 = vmul.f32 %v2043, %v2085
        %v2092 = vmul.f32 %v2044, %v2086
        %v2093 = vmul.f32 %v2045, %v2087
        %v2094 = vmul.f32 %v2046, %v2088
        %v2095 = vmul.f32 %v2047, %v2089
        %v2096 = vmul.f32 %v2048, %v2090
        %v2097 = vlaneseq
        %v2098 = vshrl.u32 %v2097, 7
        %v2099 = vsub.s32 4, %v2098
        %v2100 = vrot.slane %v523, %v2099
        %v2101 = vmul.f32 %v2091, %v2100
        %v2102 = vmul.f32 %v2092, %v2100
        %v2103 = vmul.f32 %v2093, %v2100
        %v2104 = vmul.f32 %v2094, %v2100
        %v2105 = vmul.f32 %v2095, %v2100
        %v2106 = vmul.f32 %v2096, %v2100
        %v2107 = vlaneseq
        %v2108 = vshrl.u32 %v2107, 7
        %v2109 = vsub.s32 5, %v2108
        %v2110 = vrot.slane %v523, %v2109
        %v2111 = vadd.f32 %v2101, %v2110
        %v2112 = vadd.f32 %v2102, %v2110
        %v2113 = vadd.f32 %v2103, %v2110
        %v2114 = vadd.f32 %v2104, %v2110
        %v2115 = vadd.f32 %v2105, %v2110
        %v2116 = vadd.f32 %v2106, %v2110
        %v2117 = vsel %vm587, %v2111, 0.0
        %v2118 = vsel %vm587, %v2112, 0.0
        %v2119 = vadd.f32 %v2117, %v2118
        %v2120 = vsel %vm587, %v2113, 0.0
        %v2121 = vadd.f32 %v2119, %v2120
        %v2122 = vsel %vm587, %v2114, 0.0
        %v2123 = vadd.f32 %v2121, %v2122
        %v2124 = vsel %vm587, %v2115, 0.0
        %v2125 = vadd.f32 %v2123, %v2124
        %v2126 = vsel %vm587, %v2116, 0.0
        %v2127 = vadd.f32 %v2125, %v2126
        %v2128 = vrot.slane %v2127, 4
        %v2129 = vadd.f32 %v2127, %v2128
        %v2130 = vrot.slane %v2129, 2
        %v2131 = vadd.f32 %v2129, %v2130
        %v2132 = vrot.slane %v2131, 1
        %v2133 = vadd.f32 %v2131, %v2132
        %v2134 = vrcp.pop 48.0
        %v2135 = vmul.f32 %v2133, %v2134
        %v2136 = vpack.c.bf16 %v2135, %v2135
        %v2137 = vld [vmem:[%s8] sm:$0xf]
        %v2138 = vld [vmem:[%s8 + $0x4] sm:$0xf]
        %v2139 = vld [vmem:[%s8 + $0x8] sm:$0xf]
        %v2140 = vld [vmem:[%s8 + $0xc] sm:$0xf]
        %v2141 = vld [vmem:[%s14] sm:$0x1]
        %v2146 = vunpack.c.l.b16 %v2137
        %v2147 = vunpack.c.l.b16 %v2138
        %v2148 = vunpack.c.l.b16 %v2139
        %v2149 = vunpack.c.l.b16 %v2140
        %v2150 = vpack.c.b16 %v2147, %v2146
        %v2151 = vpack.c.b16 %v2149, %v2148
        %v2155 = vsel %vm587, %v2136, 0
        %2157 = vmatprep.subr.bf16.mxu0 0
        %2158 = vmatpush1.bf16.msra.mxu0 %v2150
        %2159 = vmatprep.subr.bf16.mxu0 0
        %2160 = vmatpush1.bf16.msra.mxu0 %v2151
        %2161 = vmatprep.subr.bf16.mxu0 0
        %2162 = vmatpush1.bf16.msra.mxu0 0
        %2163 = vmatprep.subr.bf16.mxu0 0
        %2164 = vmatpush1.bf16.msra.mxu0 0
        %2165 = vmatprep.subr.bf16.mxu0 0
        %2166 = vmatpush1.bf16.msra.mxu0 0
        %2167 = vmatprep.subr.bf16.mxu0 0
        %2168 = vmatpush1.bf16.msra.mxu0 0
        %2169 = vmatprep.subr.bf16.mxu0 0
        %2170 = vmatpush1.bf16.msra.mxu0 0
        %2171 = vmatprep.subr.bf16.mxu0 0
        %2172 = vmatpush1.bf16.msra.mxu0 0
        %2173 = vmatprep.subr.bf16.mxu0 0
        %2174 = vmatpush1.bf16.msra.mxu0 0
        %2175 = vmatprep.subr.bf16.mxu0 0
        %2176 = vmatpush1.bf16.msra.mxu0 0
        %2177 = vmatprep.subr.bf16.mxu0 0
        %2178 = vmatpush1.bf16.msra.mxu0 0
        %2179 = vmatprep.subr.bf16.mxu0 0
        %2180 = vmatpush1.bf16.msra.mxu0 0
        %2181 = vmatprep.subr.bf16.mxu0 0
        %2182 = vmatpush1.bf16.msra.mxu0 0
        %2183 = vmatprep.subr.bf16.mxu0 0
        %2184 = vmatpush1.bf16.msra.mxu0 0
        %2185 = vmatprep.subr.bf16.mxu0 0
        %2186 = vmatpush1.bf16.msra.mxu0 0
        %2187 = vmatprep.subr.bf16.mxu0 0
        %2188 = vmatpush1.bf16.msra.mxu0 0
        %2189 = vmatprep.mubr.bf16.mxu0 0
        %2190 = vmatmul.mubr.bf16.gmra.mrb[0].mxu0 %v2155
        %v2191 = vpop.f32.mrb[0].mxu0
        %v2192 = vadd.f32 %v2141, %v2191
        %v2193 = vpop.f32.mrb[0].mxu0
        %v2194 = vpop.f32.mrb[0].mxu0
        %v2195 = vpop.f32.mrb[0].mxu0
        %2196 = vdwg.mxu0
        %2197 = vst [vmem:[%s501] sm:$0x1] %v2192
        %s2198 = sand.u32 %s362, 1
        %s2199 = scalar_lea.sflag [#allocation3], %s2198
        %s2200 = sand.u32 %s362, 1
        %s2201 = scalar_lea.vmem [#allocation2], %s2200
        // Predicated region
        $region81: #{tpu_custom_call.1} parent=79 // pred_check
          %p2202 = pneg %p372
        $region82: #{tpu_custom_call.1} parent=79 // pred_check_branch
          %2204 = sbr.rel (%p2202) target = $region84
        $region83: #{tpu_custom_call.1} parent=79 // pred_region
          %s2206 = ssub.s32 16, 16
          %2207 = vsyncadd %s2199, %s2206
          %s2208 = smul.addr %s29, 16
          %s2209 = scalar_lea.hbm %s15, %s2208
          %s2211 = sshll.u32 %s2201, 4
          %s2212 = int_to_ptr.vmem [resolvable:$true] %s2211
          %2214 = dma.vmem_to_hbm [thread:$0]  %s2212, 16, %s2209, %s2199
        $region84: #{tpu_custom_call.1} parent=79 // pred_fallthru
          _
      $region80: #{tpu_custom_call.1} parent=5 // pred_fallthru
        _
      %p2215 = scmp.le.s32.totalorder 2, %s24
      // Predicated region
      $region85: #{tpu_custom_call.1} parent=5 // pred_check
        %p2216 = pneg %p2215
      $region86: #{tpu_custom_call.1} parent=5 // pred_check_branch
        %2218 = sbr.rel (%p2216) target = $region88
      $region87: #{tpu_custom_call.1} parent=5 // pred_region
        %s2219 = ssub.s32 %s24, 2
        // Predicated region
        $region89: #{tpu_custom_call.1} parent=87 // pred_check
          %p2220 = pneg %p378
        $region90: #{tpu_custom_call.1} parent=87 // pred_check_branch
          %2222 = sbr.rel (%p2220) target = $region92
        $region91: #{tpu_custom_call.1} parent=87 // pred_region
          %s2223 = sand.u32 %s363, 1
          %s2224 = scalar_lea.sflag [#allocation3], %s2223
          %s2225 = sand.u32 %s363, 1
          %s2226 = scalar_lea.vmem [#allocation2], %s2225
          %2227 = dma.done %s2224, 16
        $region92: #{tpu_custom_call.1} parent=87 // pred_fallthru
          _
      $region88: #{tpu_custom_call.1} parent=5 // pred_fallthru
        _
    $region6: #{tpu_custom_call.1} parent=1 // loop_footer
      %s28 = sadd.s32 1, %s24
    $region7: #{tpu_custom_call.1} parent=1 // loop_footer_branch
      %23 = sbr.rel target = $region3
    $region8: #{tpu_custom_call.1} parent=1 // loop_exit
      _
    %2228 = vsyncpa [#allocation3], 1
    %s2229 = scalar_lea.sflag [#allocation3], 1
    %2230 = vsyncpa %s2229, 1

</llo_original>
